<compile_context>
chip_gen: v7x
topology: tpu7x:2x2x1
jax: 0.10.0
libtpu: 0.0.40
codegen_flags: <defaults>
</compile_context>

<pallas_src>
import jax
import jax.numpy as jnp
import numpy as np
from jax import lax
from jax.experimental import pallas as pl
from jax.experimental.pallas import tpu as pltpu

NEG_SLOPE = 0.01  # F.leaky_relu default


def _leaky(t):
    return jnp.where(t >= 0, t, NEG_SLOPE * t)


# ------------------------------ fused kernel ------------------------------
def fused_res_up_kernel(x_ref, xh_ref, w1_ref, b1_ref, wa_ref, b2_ref,
                        w3_ref, b3_ref, wu_ref, bu_ref, o_ref):
    R, Cin = x_ref.shape          # R = TH*W flattened rows of this spatial tile
    W = xh_ref.shape[0]           # image width
    TH = R // W                   # rows of the tile
    bf16 = jnp.bfloat16

    x = x_ref[...]                                        # (R, Cin) f32
    xh = xh_ref[...]                                      # (W, Cin) halo row
    xe = jnp.concatenate([x, xh, jnp.zeros((W, Cin), x.dtype)], axis=0)

    # ---- stage 1: conv1 (1x1) + folded bn1 + leaky_relu (incl. halo row) ----
    t1 = jnp.dot(xe.astype(bf16), w1_ref[...],
                 preferred_element_type=jnp.float32)
    t1 = _leaky(t1 + b1_ref[...])                         # ((TH+2)*W, Cout)

    # ---- shifted views (row r = i*W + j):
    #      a00=t1[i,j]  a01=t1[i,j+1]  a10=t1[i+1,j]  a11=t1[i+1,j+1]
    #      taps that fall past the right / bottom image edge contribute zero ----
    r_idx = lax.broadcasted_iota(jnp.int32, (R, 1), 0)
    mcol = (r_idx % W) < (W - 1)
    row_lim = jnp.where(pl.program_id(1) < pl.num_programs(1) - 1,
                        R, (TH - 1) * W)
    mrow = r_idx < row_lim

    a00 = t1[:R].astype(bf16)
    a01 = jnp.where(mcol, t1[1:R + 1], 0.0).astype(bf16)
    a10 = jnp.where(mrow, t1[W:R + W], 0.0).astype(bf16)
    a11 = jnp.where(mcol & mrow, t1[W + 1:R + W + 1], 0.0).astype(bf16)

    # ---- stride-2 3x3 deconv (taps pre-packed per output parity) + bn2 + lrelu ----
    p = jnp.dot(a00, wa_ref[0], preferred_element_type=jnp.float32)
    p = p + jnp.dot(a01, wa_ref[1], preferred_element_type=jnp.float32)
    p = p + jnp.dot(a10, wa_ref[2], preferred_element_type=jnp.float32)
    p = p + jnp.dot(a11, wa_ref[3], preferred_element_type=jnp.float32)
    t2 = _leaky(p + b2_ref[...])                          # (R, 4*Cout)

    # ---- conv3 (1x1) + bn3: block-diagonal weight keeps parities packed ----
    t3 = jnp.dot(t2.astype(bf16), w3_ref[...],
                 preferred_element_type=jnp.float32) + b3_ref[...]

    # ---- residual: upsample deconv (k=2, s=2) + bnu, all parities in one dot ----
    res = jnp.dot(x.astype(bf16), wu_ref[...],
                  preferred_element_type=jnp.float32) + bu_ref[...]

    o_ref[...] = _leaky(t3 + res)                         # (R, 4*Cout)


# --------------------------- weight preparation ---------------------------
def _fold_params(params):
    """Fold inference BN into conv weights/biases; pack deconv parities on lanes."""
    f32 = jnp.float32
    cout = params["w1"].shape[1]

    bn1_s, bn1_b = params["bn1_s"], params["bn1_b"]       # (1, Cout) each
    bn2_s, bn2_b = params["bn2_s"], params["bn2_b"]
    bn3_s, bn3_b = params["bn3_s"], params["bn3_b"]
    bnu_s, bnu_b = params["bnu_s"], params["bnu_b"]

    w1f = (params["w1"] * bn1_s).astype(jnp.bfloat16)                 # (Cin, Cout)
    b1f = (params["b1"] * bn1_s + bn1_b).astype(f32)                  # (1, Cout)

    w2f = params["w2"] * bn2_s                                        # (3,3,Cout,Cout)
    z = jnp.zeros((cout, cout), f32)
    # parity q = 2*py + px; out[2i+py, 2j+px] = sum over shifts a_shift @ tap
    wa = jnp.stack([
        jnp.concatenate([w2f[1, 1], w2f[1, 2], w2f[2, 1], w2f[2, 2]], axis=1),
        jnp.concatenate([z,         w2f[1, 0], z,         w2f[2, 0]], axis=1),
        jnp.concatenate([z,         z,         w2f[0, 1], w2f[0, 2]], axis=1),
        jnp.concatenate([z,         z,         z,         w2f[0, 0]], axis=1),
    ], axis=0).astype(jnp.bfloat16)                                   # (4, Cout, 4Cout)
    b2p = jnp.tile(bn2_b, (1, 4)).astype(f32)                         # (1, 4Cout)

    w3f = params["w3"] * bn3_s
    w3blk = jnp.kron(jnp.eye(4, dtype=f32), w3f).astype(jnp.bfloat16)  # (4C, 4C)
    b3p = jnp.tile(params["b3"] * bn3_s + bn3_b, (1, 4)).astype(f32)

    wuf = params["wu"] * bnu_s                                        # (2,2,Cin,Cout)
    wup = jnp.concatenate([wuf[0, 0], wuf[0, 1], wuf[1, 0], wuf[1, 1]],
                          axis=1).astype(jnp.bfloat16)                # (Cin, 4Cout)
    bup = jnp.tile(bnu_b, (1, 4)).astype(f32)
    return w1f, b1f, wa, b2p, w3blk, b3p, wup, bup


# --------------------------------- wrapper ---------------------------------
def res_up_block(x_nchw, params, *, block_rows=2048):
    N, Cin, H, W = x_nchw.shape
    Cout = params["w1"].shape[1]
    C4 = 4 * Cout

    # spatial tile: TH rows per grid step (TH divides H), ~block_rows flat rows.
    th = 1
    for d in range(1, H + 1):
        if H % d == 0 and d * W <= block_rows:
            th = d
    nht = H // th
    R = th * W

    x = jnp.transpose(x_nchw, (0, 2, 3, 1)).astype(jnp.float32)       # NHWC
    x_r = x.reshape(N, nht, R, Cin)
    # one halo row per tile: first row of the next tile (zeros past the bottom)
    halo = jnp.concatenate(
        [x[:, th::th, :, :], jnp.zeros((N, 1, W, Cin), jnp.float32)], axis=1)

    w1f, b1f, wa, b2p, w3blk, b3p, wup, bup = _fold_params(params)

    out = pl.pallas_call(
        fused_res_up_kernel,
        out_shape=jax.ShapeDtypeStruct((N, nht, R, C4), jnp.float32),
        grid=(N, nht),
        in_specs=[
            pl.BlockSpec((None, None, R, Cin), lambda n, h: (n, h, 0, 0)),
            pl.BlockSpec((None, None, W, Cin), lambda n, h: (n, h, 0, 0)),
            pl.BlockSpec((Cin, Cout), lambda n, h: (0, 0)),
            pl.BlockSpec((1, Cout), lambda n, h: (0, 0)),
            pl.BlockSpec((4, Cout, C4), lambda n, h: (0, 0, 0)),
            pl.BlockSpec((1, C4), lambda n, h: (0, 0)),
            pl.BlockSpec((C4, C4), lambda n, h: (0, 0)),
            pl.BlockSpec((1, C4), lambda n, h: (0, 0)),
            pl.BlockSpec((Cin, C4), lambda n, h: (0, 0)),
            pl.BlockSpec((1, C4), lambda n, h: (0, 0)),
        ],
        out_specs=pl.BlockSpec((None, None, R, C4), lambda n, h: (n, h, 0, 0)),
        compiler_params=pltpu.CompilerParams(
            dimension_semantics=("parallel", "parallel"),
            vmem_limit_bytes=32 * 1024 * 1024),
    )(x_r, halo, w1f, b1f, wa, b2p, w3blk, b3p, wup, bup)

    # (N, nht, TH*W, 4*Cout) -> NCHW.  The parity interleave is folded into the
    # single (unavoidable) channels-last -> NCHW transpose.
    out = out.reshape(N, nht, th, W, 2, 2, Cout)
    out = jnp.transpose(out, (0, 6, 1, 2, 4, 3, 5))
    return out.reshape(N, Cout, 2 * H, 2 * W)


# ------------------------- pure-JAX reference (check) -------------------------
def res_up_block_ref(x_nchw, params):
    hp = lax.Precision.HIGHEST
    x = jnp.transpose(x_nchw, (0, 2, 3, 1)).astype(jnp.float32)
    t = jnp.einsum("nhwi,io->nhwo", x, params["w1"], precision=hp) + params["b1"][0]
    t = _leaky(t * params["bn1_s"][0] + params["bn1_b"][0])
    w2f = params["w2"][::-1, ::-1]   # spatial flip -> express deconv as dilated conv
    t = lax.conv_general_dilated(t, w2f, window_strides=(1, 1),
                                 padding=((1, 2), (1, 2)), lhs_dilation=(2, 2),
                                 dimension_numbers=("NHWC", "HWIO", "NHWC"),
                                 precision=hp)
    t = _leaky(t * params["bn2_s"][0] + params["bn2_b"][0])
    t = jnp.einsum("nhwi,io->nhwo", t, params["w3"], precision=hp) + params["b3"][0]
    t = t * params["bn3_s"][0] + params["bn3_b"][0]
    wuf = params["wu"][::-1, ::-1]
    r = lax.conv_general_dilated(x, wuf, window_strides=(1, 1),
                                 padding=((1, 1), (1, 1)), lhs_dilation=(2, 2),
                                 dimension_numbers=("NHWC", "HWIO", "NHWC"),
                                 precision=hp)
    r = r * params["bnu_s"][0] + params["bnu_b"][0]
    return jnp.transpose(_leaky(t + r), (0, 3, 1, 2))


# ---------------------------- parameter init ----------------------------
def init_params(key, cin, cout):
    ks = jax.random.split(key, 10)

    def bn(k):
        k1, k2, k3, k4 = jax.random.split(k, 4)
        gamma = 1.0 + 0.1 * jax.random.normal(k1, (cout,), jnp.float32)
        beta = 0.1 * jax.random.normal(k2, (cout,), jnp.float32)
        mean = 0.1 * jax.random.normal(k3, (cout,), jnp.float32)
        var = jax.random.uniform(k4, (cout,), jnp.float32, 0.5, 1.5)
        scale = gamma * lax.rsqrt(var + 1e-5)
        shift = beta - mean * scale
        return scale.reshape(1, cout), shift.reshape(1, cout)

    p = {}
    p["w1"] = 0.2 * jax.random.normal(ks[0], (cin, cout), jnp.float32)
    p["b1"] = 0.1 * jax.random.normal(ks[1], (1, cout), jnp.float32)
    p["bn1_s"], p["bn1_b"] = bn(ks[2])
    p["w2"] = 0.2 * jax.random.normal(ks[3], (3, 3, cout, cout), jnp.float32)
    p["bn2_s"], p["bn2_b"] = bn(ks[4])
    p["w3"] = 0.2 * jax.random.normal(ks[5], (cout, cout), jnp.float32)
    p["b3"] = 0.1 * jax.random.normal(ks[6], (1, cout), jnp.float32)
    p["bn3_s"], p["bn3_b"] = bn(ks[7])
    p["wu"] = 0.2 * jax.random.normal(ks[8], (2, 2, cin, cout), jnp.float32)
    p["bnu_s"], p["bnu_b"] = bn(ks[9])
    return p


if __name__ == "__main__":
    N, Cin, Cout, H, W = 2, 4, 8, 16, 16
    key = jax.random.PRNGKey(0)
    kx, kp = jax.random.split(key)
    x = jax.random.normal(kx, (N, Cin, H, W), jnp.float32)
    params = init_params(kp, Cin, Cout)

    # block_rows=128 -> TH=8, two spatial tiles: exercises the halo/mask path.
    fn = jax.jit(lambda xx, pp: res_up_block(xx, pp, block_rows=128))
    out = jax.block_until_ready(fn(x, params))

    assert out.shape == (N, Cout, 2 * H, 2 * W), out.shape
    ref = res_up_block_ref(x, params)
    np.testing.assert_allclose(np.asarray(out), np.asarray(ref),
                               rtol=5e-2, atol=5e-2)
    print("KERNEL_OK")
</pallas_src>

<mosaic_0001>
module attributes {stable_mosaic.version = 11 : i64} {
  func.func @fused_res_up_kernel(%arg0: i32, %arg1: i32, %arg2: memref<1x1x128x4xf32, #tpu.memory_space<vmem>>, %arg3: memref<1x1x16x4xf32, #tpu.memory_space<vmem>>, %arg4: memref<4x8xbf16, #tpu.memory_space<vmem>>, %arg5: memref<1x8xf32, #tpu.memory_space<vmem>>, %arg6: memref<4x8x32xbf16, #tpu.memory_space<vmem>>, %arg7: memref<1x32xf32, #tpu.memory_space<vmem>>, %arg8: memref<32x32xbf16, #tpu.memory_space<vmem>>, %arg9: memref<1x32xf32, #tpu.memory_space<vmem>>, %arg10: memref<4x32xbf16, #tpu.memory_space<vmem>>, %arg11: memref<1x32xf32, #tpu.memory_space<vmem>>, %arg12: memref<1x1x128x32xf32, #tpu.memory_space<vmem>>) attributes {dimension_semantics = [#tpu.dimension_semantics<parallel>, #tpu.dimension_semantics<parallel>], iteration_bounds = array<i64: 2, 2>, scalar_prefetch = 0 : i64, scratch_operands = 0 : i64, tpu.core_type = #tpu.core_type<tc>, window_params = [{transform_indices = @transform_0, window_bounds = array<i64: 1, 1, 128, 4>}, {transform_indices = @transform_1, window_bounds = array<i64: 1, 1, 16, 4>}, {pipeline_mode = #tpu.pipeline_mode<synchronous>, transform_indices = @transform_2, window_bounds = array<i64: 4, 8>}, {pipeline_mode = #tpu.pipeline_mode<synchronous>, transform_indices = @transform_3, window_bounds = array<i64: 1, 8>}, {pipeline_mode = #tpu.pipeline_mode<synchronous>, transform_indices = @transform_4, window_bounds = array<i64: 4, 8, 32>}, {pipeline_mode = #tpu.pipeline_mode<synchronous>, transform_indices = @transform_5, window_bounds = array<i64: 1, 32>}, {pipeline_mode = #tpu.pipeline_mode<synchronous>, transform_indices = @transform_6, window_bounds = array<i64: 32, 32>}, {pipeline_mode = #tpu.pipeline_mode<synchronous>, transform_indices = @transform_7, window_bounds = array<i64: 1, 32>}, {pipeline_mode = #tpu.pipeline_mode<synchronous>, transform_indices = @transform_8, window_bounds = array<i64: 4, 32>}, {pipeline_mode = #tpu.pipeline_mode<synchronous>, transform_indices = @transform_9, window_bounds = array<i64: 1, 32>}, {transform_indices = @transform_10, window_bounds = array<i64: 1, 1, 128, 32>}]} {
    %c0 = arith.constant 0 : index
    %c0_0 = arith.constant 0 : index
    %c0_1 = arith.constant 0 : index
    %c0_2 = arith.constant 0 : index
    %0 = vector.load %arg2[%c0, %c0_0, %c0_1, %c0_2] : memref<1x1x128x4xf32, #tpu.memory_space<vmem>>, vector<1x1x128x4xf32>
    %1 = vector.shape_cast %0 : vector<1x1x128x4xf32> to vector<128x4xf32>
    %c0_3 = arith.constant 0 : index
    %c0_4 = arith.constant 0 : index
    %c0_5 = arith.constant 0 : index
    %c0_6 = arith.constant 0 : index
    %2 = vector.load %arg3[%c0_3, %c0_4, %c0_5, %c0_6] : memref<1x1x16x4xf32, #tpu.memory_space<vmem>>, vector<1x1x16x4xf32>
    %3 = vector.shape_cast %2 : vector<1x1x16x4xf32> to vector<16x4xf32>
    %cst = arith.constant 0.000000e+00 : f32
    %4 = vector.broadcast %cst : f32 to vector<16x4xf32>
    %5 = tpu.concatenate %1, %3, %4 in 0 : vector<128x4xf32>, vector<16x4xf32>, vector<16x4xf32> -> vector<160x4xf32>
    %6 = arith.truncf %5 : vector<160x4xf32> to vector<160x4xbf16>
    %c0_7 = arith.constant 0 : index
    %c0_8 = arith.constant 0 : index
    %7 = vector.load %arg4[%c0_7, %c0_8] : memref<4x8xbf16, #tpu.memory_space<vmem>>, vector<4x8xbf16>
    %cst_9 = arith.constant dense<0.000000e+00> : vector<160x8xf32>
    %8 = tpu.matmul %6, %7, %cst_9 {dimension_numbers = #tpu.dot_dimension_numbers<[1], [0], [0], [1], [0, 0, 1, 1], [], []>} : vector<160x4xbf16>, vector<4x8xbf16>, vector<160x8xf32> -> vector<160x8xf32>
    %c0_10 = arith.constant 0 : index
    %c0_11 = arith.constant 0 : index
    %9 = vector.load %arg5[%c0_10, %c0_11] : memref<1x8xf32, #tpu.memory_space<vmem>>, vector<1x8xf32>
    %10 = vector.broadcast %9 : vector<1x8xf32> to vector<160x8xf32>
    %11 = arith.addf %8, %10 : vector<160x8xf32>
    %cst_12 = arith.constant 0.000000e+00 : f32
    %12 = vector.broadcast %cst_12 : f32 to vector<160x8xf32>
    %13 = arith.cmpf oge, %11, %12 : vector<160x8xf32>
    %cst_13 = arith.constant 0.00999999977 : f32
    %14 = vector.broadcast %cst_13 : f32 to vector<160x8xf32>
    %15 = arith.mulf %14, %11 : vector<160x8xf32>
    %16 = arith.select %13, %11, %15 : vector<160x8xi1>, vector<160x8xf32>
    %17 = tpu.iota {dimensions = array<i32: 0>} : vector<128x1xi32>
    %c16_i32 = arith.constant 16 : i32
    %c0_i32 = arith.constant 0 : i32
    %18 = arith.cmpi eq, %c16_i32, %c0_i32 : i32
    %c1_i32 = arith.constant 1 : i32
    %19 = arith.select %18, %c1_i32, %c16_i32 : i32
    %20 = vector.broadcast %19 : i32 to vector<128x1xi32>
    %21 = arith.remsi %17, %20 : vector<128x1xi32>
    %c0_i32_14 = arith.constant 0 : i32
    %22 = vector.broadcast %c0_i32_14 : i32 to vector<128x1xi32>
    %23 = arith.cmpi ne, %21, %22 : vector<128x1xi32>
    %c0_i32_15 = arith.constant 0 : i32
    %24 = vector.broadcast %c0_i32_15 : i32 to vector<128x1xi32>
    %25 = arith.cmpi slt, %21, %24 : vector<128x1xi32>
    %c0_i32_16 = arith.constant 0 : i32
    %26 = arith.cmpi slt, %19, %c0_i32_16 : i32
    %27 = vector.broadcast %26 : i1 to vector<128x1xi1>
    %28 = vector.broadcast %27 : vector<128x1xi1> to vector<128x1xi1>
    %29 = arith.xori %25, %28 : vector<128x1xi1>
    %30 = arith.andi %29, %23 : vector<128x1xi1>
    %31 = vector.broadcast %19 : i32 to vector<128x1xi32>
    %32 = arith.addi %21, %31 : vector<128x1xi32>
    %33 = arith.select %30, %32, %21 : vector<128x1xi1>, vector<128x1xi32>
    %c15_i32 = arith.constant 15 : i32
    %34 = vector.broadcast %c15_i32 : i32 to vector<128x1xi32>
    %35 = arith.cmpi slt, %33, %34 : vector<128x1xi32>
    %c1_i32_17 = arith.constant 1 : i32
    %36 = arith.cmpi slt, %arg1, %c1_i32_17 : i32
    %c128_i32 = arith.constant 128 : i32
    %c112_i32 = arith.constant 112 : i32
    %37 = arith.select %36, %c128_i32, %c112_i32 : i32
    %38 = vector.broadcast %37 : i32 to vector<128x1xi32>
    %39 = arith.cmpi slt, %17, %38 : vector<128x1xi32>
    %40 = vector.extract_strided_slice %16 {offsets = [0, 0], sizes = [128, 8], strides = [1, 1]} : vector<160x8xf32> to vector<128x8xf32>
    %41 = arith.truncf %40 : vector<128x8xf32> to vector<128x8xbf16>
    %42 = vector.extract_strided_slice %16 {offsets = [1, 0], sizes = [128, 8], strides = [1, 1]} : vector<160x8xf32> to vector<128x8xf32>
    %cst_18 = arith.constant 0.000000e+00 : f32
    %43 = vector.shape_cast %35 : vector<128x1xi1> to vector<128x1xi1>
    %44 = vector.broadcast %43 : vector<128x1xi1> to vector<128x8xi1>
    %45 = vector.broadcast %cst_18 : f32 to vector<128x8xf32>
    %46 = arith.select %44, %42, %45 : vector<128x8xi1>, vector<128x8xf32>
    %47 = arith.truncf %46 : vector<128x8xf32> to vector<128x8xbf16>
    %48 = vector.extract_strided_slice %16 {offsets = [16, 0], sizes = [128, 8], strides = [1, 1]} : vector<160x8xf32> to vector<128x8xf32>
    %cst_19 = arith.constant 0.000000e+00 : f32
    %49 = vector.shape_cast %39 : vector<128x1xi1> to vector<128x1xi1>
    %50 = vector.broadcast %49 : vector<128x1xi1> to vector<128x8xi1>
    %51 = vector.broadcast %cst_19 : f32 to vector<128x8xf32>
    %52 = arith.select %50, %48, %51 : vector<128x8xi1>, vector<128x8xf32>
    %53 = arith.truncf %52 : vector<128x8xf32> to vector<128x8xbf16>
    %54 = arith.andi %35, %39 : vector<128x1xi1>
    %55 = vector.extract_strided_slice %16 {offsets = [17, 0], sizes = [128, 8], strides = [1, 1]} : vector<160x8xf32> to vector<128x8xf32>
    %cst_20 = arith.constant 0.000000e+00 : f32
    %56 = vector.shape_cast %54 : vector<128x1xi1> to vector<128x1xi1>
    %57 = vector.broadcast %56 : vector<128x1xi1> to vector<128x8xi1>
    %58 = vector.broadcast %cst_20 : f32 to vector<128x8xf32>
    %59 = arith.select %57, %55, %58 : vector<128x8xi1>, vector<128x8xf32>
    %60 = arith.truncf %59 : vector<128x8xf32> to vector<128x8xbf16>
    %c0_21 = arith.constant 0 : index
    %c0_22 = arith.constant 0 : index
    %c0_23 = arith.constant 0 : index
    %61 = vector.load %arg6[%c0_21, %c0_22, %c0_23] : memref<4x8x32xbf16, #tpu.memory_space<vmem>>, vector<1x8x32xbf16>
    %62 = vector.shape_cast %61 : vector<1x8x32xbf16> to vector<8x32xbf16>
    %cst_24 = arith.constant dense<0.000000e+00> : vector<128x32xf32>
    %63 = tpu.matmul %41, %62, %cst_24 {dimension_numbers = #tpu.dot_dimension_numbers<[1], [0], [0], [1], [0, 0, 1, 1], [], []>} : vector<128x8xbf16>, vector<8x32xbf16>, vector<128x32xf32> -> vector<128x32xf32>
    %c1 = arith.constant 1 : index
    %c0_25 = arith.constant 0 : index
    %c0_26 = arith.constant 0 : index
    %64 = vector.load %arg6[%c1, %c0_25, %c0_26] : memref<4x8x32xbf16, #tpu.memory_space<vmem>>, vector<1x8x32xbf16>
    %65 = vector.shape_cast %64 : vector<1x8x32xbf16> to vector<8x32xbf16>
    %cst_27 = arith.constant dense<0.000000e+00> : vector<128x32xf32>
    %66 = tpu.matmul %47, %65, %cst_27 {dimension_numbers = #tpu.dot_dimension_numbers<[1], [0], [0], [1], [0, 0, 1, 1], [], []>} : vector<128x8xbf16>, vector<8x32xbf16>, vector<128x32xf32> -> vector<128x32xf32>
    %67 = arith.addf %63, %66 : vector<128x32xf32>
    %c2 = arith.constant 2 : index
    %c0_28 = arith.constant 0 : index
    %c0_29 = arith.constant 0 : index
    %68 = vector.load %arg6[%c2, %c0_28, %c0_29] : memref<4x8x32xbf16, #tpu.memory_space<vmem>>, vector<1x8x32xbf16>
    %69 = vector.shape_cast %68 : vector<1x8x32xbf16> to vector<8x32xbf16>
    %cst_30 = arith.constant dense<0.000000e+00> : vector<128x32xf32>
    %70 = tpu.matmul %53, %69, %cst_30 {dimension_numbers = #tpu.dot_dimension_numbers<[1], [0], [0], [1], [0, 0, 1, 1], [], []>} : vector<128x8xbf16>, vector<8x32xbf16>, vector<128x32xf32> -> vector<128x32xf32>
    %71 = arith.addf %67, %70 : vector<128x32xf32>
    %c3 = arith.constant 3 : index
    %c0_31 = arith.constant 0 : index
    %c0_32 = arith.constant 0 : index
    %72 = vector.load %arg6[%c3, %c0_31, %c0_32] : memref<4x8x32xbf16, #tpu.memory_space<vmem>>, vector<1x8x32xbf16>
    %73 = vector.shape_cast %72 : vector<1x8x32xbf16> to vector<8x32xbf16>
    %cst_33 = arith.constant dense<0.000000e+00> : vector<128x32xf32>
    %74 = tpu.matmul %60, %73, %cst_33 {dimension_numbers = #tpu.dot_dimension_numbers<[1], [0], [0], [1], [0, 0, 1, 1], [], []>} : vector<128x8xbf16>, vector<8x32xbf16>, vector<128x32xf32> -> vector<128x32xf32>
    %75 = arith.addf %71, %74 : vector<128x32xf32>
    %c0_34 = arith.constant 0 : index
    %c0_35 = arith.constant 0 : index
    %76 = vector.load %arg7[%c0_34, %c0_35] : memref<1x32xf32, #tpu.memory_space<vmem>>, vector<1x32xf32>
    %77 = vector.broadcast %76 : vector<1x32xf32> to vector<128x32xf32>
    %78 = arith.addf %75, %77 : vector<128x32xf32>
    %cst_36 = arith.constant 0.000000e+00 : f32
    %79 = vector.broadcast %cst_36 : f32 to vector<128x32xf32>
    %80 = arith.cmpf oge, %78, %79 : vector<128x32xf32>
    %cst_37 = arith.constant 0.00999999977 : f32
    %81 = vector.broadcast %cst_37 : f32 to vector<128x32xf32>
    %82 = arith.mulf %81, %78 : vector<128x32xf32>
    %83 = arith.select %80, %78, %82 : vector<128x32xi1>, vector<128x32xf32>
    %84 = arith.truncf %83 : vector<128x32xf32> to vector<128x32xbf16>
    %c0_38 = arith.constant 0 : index
    %c0_39 = arith.constant 0 : index
    %85 = vector.load %arg8[%c0_38, %c0_39] : memref<32x32xbf16, #tpu.memory_space<vmem>>, vector<32x32xbf16>
    %cst_40 = arith.constant dense<0.000000e+00> : vector<128x32xf32>
    %86 = tpu.matmul %84, %85, %cst_40 {dimension_numbers = #tpu.dot_dimension_numbers<[1], [0], [0], [1], [0, 0, 1, 1], [], []>} : vector<128x32xbf16>, vector<32x32xbf16>, vector<128x32xf32> -> vector<128x32xf32>
    %c0_41 = arith.constant 0 : index
    %c0_42 = arith.constant 0 : index
    %87 = vector.load %arg9[%c0_41, %c0_42] : memref<1x32xf32, #tpu.memory_space<vmem>>, vector<1x32xf32>
    %88 = vector.broadcast %87 : vector<1x32xf32> to vector<128x32xf32>
    %89 = arith.addf %86, %88 : vector<128x32xf32>
    %90 = arith.truncf %1 : vector<128x4xf32> to vector<128x4xbf16>
    %c0_43 = arith.constant 0 : index
    %c0_44 = arith.constant 0 : index
    %91 = vector.load %arg10[%c0_43, %c0_44] : memref<4x32xbf16, #tpu.memory_space<vmem>>, vector<4x32xbf16>
    %cst_45 = arith.constant dense<0.000000e+00> : vector<128x32xf32>
    %92 = tpu.matmul %90, %91, %cst_45 {dimension_numbers = #tpu.dot_dimension_numbers<[1], [0], [0], [1], [0, 0, 1, 1], [], []>} : vector<128x4xbf16>, vector<4x32xbf16>, vector<128x32xf32> -> vector<128x32xf32>
    %c0_46 = arith.constant 0 : index
    %c0_47 = arith.constant 0 : index
    %93 = vector.load %arg11[%c0_46, %c0_47] : memref<1x32xf32, #tpu.memory_space<vmem>>, vector<1x32xf32>
    %94 = vector.broadcast %93 : vector<1x32xf32> to vector<128x32xf32>
    %95 = arith.addf %92, %94 : vector<128x32xf32>
    %96 = arith.addf %89, %95 : vector<128x32xf32>
    %cst_48 = arith.constant 0.000000e+00 : f32
    %97 = vector.broadcast %cst_48 : f32 to vector<128x32xf32>
    %98 = arith.cmpf oge, %96, %97 : vector<128x32xf32>
    %cst_49 = arith.constant 0.00999999977 : f32
    %99 = vector.broadcast %cst_49 : f32 to vector<128x32xf32>
    %100 = arith.mulf %99, %96 : vector<128x32xf32>
    %101 = arith.select %98, %96, %100 : vector<128x32xi1>, vector<128x32xf32>
    %c0_50 = arith.constant 0 : index
    %c0_51 = arith.constant 0 : index
    %c0_52 = arith.constant 0 : index
    %c0_53 = arith.constant 0 : index
    %102 = vector.load %arg12[%c0_50, %c0_51, %c0_52, %c0_53] : memref<1x1x128x32xf32, #tpu.memory_space<vmem>>, vector<1x1x128x32xf32>
    %103 = vector.shape_cast %102 : vector<1x1x128x32xf32> to vector<128x32xf32>
    %104 = vector.shape_cast %101 : vector<128x32xf32> to vector<1x1x128x32xf32>
    tpu.vector_store %arg12[%c0_50, %c0_51, %c0_52, %c0_53], %104 {strides = array<i32>} : memref<1x1x128x32xf32, #tpu.memory_space<vmem>>, vector<1x1x128x32xf32>,
    return
  }
  func.func @transform_0(%arg0: i32, %arg1: i32) -> (i32, i32, i32, i32) {
    %c0_i32 = arith.constant 0 : i32
    %c0_i32_0 = arith.constant 0 : i32
    %c0_i32_1 = arith.constant 0 : i32
    return %arg0, %arg1, %c0_i32, %c0_i32_0 : i32, i32, i32, i32
  }
  func.func @transform_1(%arg0: i32, %arg1: i32) -> (i32, i32, i32, i32) {
    %c0_i32 = arith.constant 0 : i32
    %c0_i32_0 = arith.constant 0 : i32
    %c0_i32_1 = arith.constant 0 : i32
    return %arg0, %arg1, %c0_i32, %c0_i32_0 : i32, i32, i32, i32
  }
  func.func @transform_2(%arg0: i32, %arg1: i32) -> (i32, i32) {
    %c0_i32 = arith.constant 0 : i32
    %c0_i32_0 = arith.constant 0 : i32
    %c0_i32_1 = arith.constant 0 : i32
    return %c0_i32, %c0_i32_0 : i32, i32
  }
  func.func @transform_3(%arg0: i32, %arg1: i32) -> (i32, i32) {
    %c0_i32 = arith.constant 0 : i32
    %c0_i32_0 = arith.constant 0 : i32
    %c0_i32_1 = arith.constant 0 : i32
    return %c0_i32, %c0_i32_0 : i32, i32
  }
  func.func @transform_4(%arg0: i32, %arg1: i32) -> (i32, i32, i32) {
    %c0_i32 = arith.constant 0 : i32
    %c0_i32_0 = arith.constant 0 : i32
    %c0_i32_1 = arith.constant 0 : i32
    %c0_i32_2 = arith.constant 0 : i32
    return %c0_i32, %c0_i32_0, %c0_i32_1 : i32, i32, i32
  }
  func.func @transform_5(%arg0: i32, %arg1: i32) -> (i32, i32) {
    %c0_i32 = arith.constant 0 : i32
    %c0_i32_0 = arith.constant 0 : i32
    %c0_i32_1 = arith.constant 0 : i32
    return %c0_i32, %c0_i32_0 : i32, i32
  }
  func.func @transform_6(%arg0: i32, %arg1: i32) -> (i32, i32) {
    %c0_i32 = arith.constant 0 : i32
    %c0_i32_0 = arith.constant 0 : i32
    %c0_i32_1 = arith.constant 0 : i32
    return %c0_i32, %c0_i32_0 : i32, i32
  }
  func.func @transform_7(%arg0: i32, %arg1: i32) -> (i32, i32) {
    %c0_i32 = arith.constant 0 : i32
    %c0_i32_0 = arith.constant 0 : i32
    %c0_i32_1 = arith.constant 0 : i32
    return %c0_i32, %c0_i32_0 : i32, i32
  }
  func.func @transform_8(%arg0: i32, %arg1: i32) -> (i32, i32) {
    %c0_i32 = arith.constant 0 : i32
    %c0_i32_0 = arith.constant 0 : i32
    %c0_i32_1 = arith.constant 0 : i32
    return %c0_i32, %c0_i32_0 : i32, i32
  }
  func.func @transform_9(%arg0: i32, %arg1: i32) -> (i32, i32) {
    %c0_i32 = arith.constant 0 : i32
    %c0_i32_0 = arith.constant 0 : i32
    %c0_i32_1 = arith.constant 0 : i32
    return %c0_i32, %c0_i32_0 : i32, i32
  }
  func.func @transform_10(%arg0: i32, %arg1: i32) -> (i32, i32, i32, i32) {
    %c0_i32 = arith.constant 0 : i32
    %c0_i32_0 = arith.constant 0 : i32
    %c0_i32_1 = arith.constant 0 : i32
    return %arg0, %arg1, %c0_i32, %c0_i32_0 : i32, i32, i32, i32
  }
}

</mosaic_0001>

<llo_original>
// kernel: _lambda_.1
$region0: #{_lambda_.1}
  #allocation0 [shape = 'u32[]', space=smem, size = 0x4, offset = 0x4, fixed_abs, tag = 'smem constant byte address 0x4 - core index']
  #allocation1 [shape = 'u32[144,128]{1,0:T(1,128)}', space=vmem, size = 0x12000, scoped, tag = 'internal scratch']
  %s0 = inlined_call_operand.vmem [shape: f32[2,2,128,4], index: 0, kind: input, shape index: {}]
  %s1 = inlined_call_operand.vmem [shape: f32[2,2,16,4], index: 1, kind: input, shape index: {}]
  %s2 = inlined_call_operand.vmem [shape: bf16[4,8], index: 2, kind: input, shape index: {}]
  %s3 = inlined_call_operand.vmem [shape: f32[1,8], index: 3, kind: input, shape index: {}]
  %s4 = inlined_call_operand.vmem [shape: bf16[4,8,32], index: 4, kind: input, shape index: {}]
  %s5 = inlined_call_operand.vmem [shape: f32[1,32], index: 5, kind: input, shape index: {}]
  %s6 = inlined_call_operand.vmem [shape: bf16[32,32], index: 6, kind: input, shape index: {}]
  %s7 = inlined_call_operand.vmem [shape: f32[1,32], index: 7, kind: input, shape index: {}]
  %s8 = inlined_call_operand.vmem [shape: bf16[4,32], index: 8, kind: input, shape index: {}]
  %s9 = inlined_call_operand.vmem [shape: f32[1,32], index: 9, kind: input, shape index: {}]
  %s10 = inlined_call_operand.vmem [shape: f32[2,2,128,32], index: 10, kind: output, shape index: {}]
  %s11 = sld [smem:[#allocation0]]
  $region73: #{_lambda_.1} parent=0
    _
  %s13 = ssub.s32 1, %s11
  %s14 = scalar_select 0, %s13, %s11
  loop: start=0, step=1, limit=6
  $region2: #{_lambda_.1} parent=0 // loop_pre_header
    _
  $region3: #{_lambda_.1} parent=0 // loop_header
    %s16 = sphi 0, %s20
    %p17 = scmp.ge.s32.totalorder %s16, 6
    %s23 = sphi 0, %s35
    %s24 = sphi 0, %s31
    %s25 = sphi 0, %s23
    %s26 = sphi 0, %s24
    %s27 = sphi 0, %s25
    %s28 = sphi 0, %s26
    %s40 = sphi 0, %s42
    %s43 = sphi 0, %s40
    %s44 = sphi 0, %s43
    %s60 = sphi 0, %s44
    %s68 = sphi 0, %s70
    %s71 = sphi 0, %s68
    %s72 = sphi 0, %s71
    %s88 = sphi 0, %s72
    %s92 = sphi 0, %s92
    %s94 = sphi 0, %s92
    %s95 = sphi 0, %s94
    %s109 = sphi 0, %s95
    %s113 = sphi 0, %s113
    %s115 = sphi 0, %s113
    %s116 = sphi 0, %s115
    %s130 = sphi 0, %s116
    %s134 = sphi 0, %s134
    %s136 = sphi 0, %s134
    %s137 = sphi 0, %s136
    %s151 = sphi 0, %s137
    %s155 = sphi 0, %s155
    %s157 = sphi 0, %s155
    %s158 = sphi 0, %s157
    %s172 = sphi 0, %s158
    %s176 = sphi 0, %s176
    %s178 = sphi 0, %s176
    %s179 = sphi 0, %s178
    %s193 = sphi 0, %s179
    %s197 = sphi 0, %s197
    %s199 = sphi 0, %s197
    %s200 = sphi 0, %s199
    %s214 = sphi 0, %s200
    %s218 = sphi 0, %s218
    %s220 = sphi 0, %s218
    %s221 = sphi 0, %s220
    %s235 = sphi 0, %s221
    %s239 = sphi 0, %s239
    %s241 = sphi 0, %s239
    %s242 = sphi 0, %s241
    %s256 = sphi 0, %s242
    %s264 = sphi 0, %s266
    %s267 = sphi 0, %s264
    %s268 = sphi 0, %s267
    %s284 = sphi 0, %s268
  $region4: #{_lambda_.1} parent=0 // loop_header_branch
    %19 = sbr.rel (%p17) target = $region8
  $region5: #{_lambda_.1} parent=0 // loop_body
    %s21 = ssub.s32 %s16, 1
    %s22 = ssub.s32 %s16, 2
    %s29 = sadd.s32 1, %s24
    %p30 = scmp.ge.s32.totalorder %s29, 2
    %s31 = scalar_select %p30, 0, %s29
    %s32 = sadd.s32 1, %s23
    %s33 = scalar_select %p30, %s32, %s23
    %p34 = scmp.ge.s32.totalorder %s33, 2
    %s35 = scalar_select %p34, 0, %s33
    %s36 = ssub.s32 %s23, %s35
    %s37 = ssub.s32 %s24, %s31
    %s38 = sor.u32 %s36, %s37
    %p39 = scmp.eq.s32.totalorder %s38, 0
    %s41 = sadd.s32 %s40, 1
    %s42 = scalar_select %p39, %s40, %s41
    %p45 = pneg %p39
    %p46 = scmp.eq.s32.totalorder %s16, 3
    %p47 = por %p45, %p46
    %p48 = scmp.ne.s32.totalorder %s40, %s43
    %p49 = scmp.eq.s32.totalorder %s16, 0
    %p50 = por %p48, %p49
    %p51 = scmp.ne.s32.totalorder %s40, %s43
    %p52 = scmp.eq.s32.totalorder %s21, 3
    %p53 = por %p51, %p52
    %p54 = scmp.ne.s32.totalorder %s43, %s44
    %p55 = scmp.eq.s32.totalorder %s21, 0
    %p56 = por %p54, %p55
    %p57 = scmp.ne.s32.totalorder %s43, %s44
    %p58 = scmp.eq.s32.totalorder %s22, 3
    %p59 = por %p57, %p58
    %p61 = scmp.ne.s32.totalorder %s44, %s60
    %p62 = scmp.eq.s32.totalorder %s22, 0
    %p63 = por %p61, %p62
    %s64 = ssub.s32 %s23, %s35
    %s65 = ssub.s32 %s24, %s31
    %s66 = sor.u32 %s64, %s65
    %p67 = scmp.eq.s32.totalorder %s66, 0
    %s69 = sadd.s32 %s68, 1
    %s70 = scalar_select %p67, %s68, %s69
    %p73 = pneg %p67
    %p74 = scmp.eq.s32.totalorder %s16, 3
    %p75 = por %p73, %p74
    %p76 = scmp.ne.s32.totalorder %s68, %s71
    %p77 = scmp.eq.s32.totalorder %s16, 0
    %p78 = por %p76, %p77
    %p79 = scmp.ne.s32.totalorder %s68, %s71
    %p80 = scmp.eq.s32.totalorder %s21, 3
    %p81 = por %p79, %p80
    %p82 = scmp.ne.s32.totalorder %s71, %s72
    %p83 = scmp.eq.s32.totalorder %s21, 0
    %p84 = por %p82, %p83
    %p85 = scmp.ne.s32.totalorder %s71, %s72
    %p86 = scmp.eq.s32.totalorder %s22, 3
    %p87 = por %p85, %p86
    %p89 = scmp.ne.s32.totalorder %s72, %s88
    %p90 = scmp.eq.s32.totalorder %s22, 0
    %p91 = por %p89, %p90
    %s93 = sadd.s32 %s92, 1
    %p96 = scmp.eq.s32.totalorder %s16, 3
    %p97 = scmp.ne.s32.totalorder %s92, %s94
    %p98 = scmp.eq.s32.totalorder %s16, 0
    %p99 = por %p97, %p98
    %p100 = scmp.ne.s32.totalorder %s92, %s94
    %p101 = scmp.eq.s32.totalorder %s21, 3
    %p102 = por %p100, %p101
    %p103 = scmp.ne.s32.totalorder %s94, %s95
    %p104 = scmp.eq.s32.totalorder %s21, 0
    %p105 = por %p103, %p104
    %p106 = scmp.ne.s32.totalorder %s94, %s95
    %p107 = scmp.eq.s32.totalorder %s22, 3
    %p108 = por %p106, %p107
    %p110 = scmp.ne.s32.totalorder %s95, %s109
    %p111 = scmp.eq.s32.totalorder %s22, 0
    %p112 = por %p110, %p111
    %s114 = sadd.s32 %s113, 1
    %p117 = scmp.eq.s32.totalorder %s16, 3
    %p118 = scmp.ne.s32.totalorder %s113, %s115
    %p119 = scmp.eq.s32.totalorder %s16, 0
    %p120 = por %p118, %p119
    %p121 = scmp.ne.s32.totalorder %s113, %s115
    %p122 = scmp.eq.s32.totalorder %s21, 3
    %p123 = por %p121, %p122
    %p124 = scmp.ne.s32.totalorder %s115, %s116
    %p125 = scmp.eq.s32.totalorder %s21, 0
    %p126 = por %p124, %p125
    %p127 = scmp.ne.s32.totalorder %s115, %s116
    %p128 = scmp.eq.s32.totalorder %s22, 3
    %p129 = por %p127, %p128
    %p131 = scmp.ne.s32.totalorder %s116, %s130
    %p132 = scmp.eq.s32.totalorder %s22, 0
    %p133 = por %p131, %p132
    %s135 = sadd.s32 %s134, 1
    %p138 = scmp.eq.s32.totalorder %s16, 3
    %p139 = scmp.ne.s32.totalorder %s134, %s136
    %p140 = scmp.eq.s32.totalorder %s16, 0
    %p141 = por %p139, %p140
    %p142 = scmp.ne.s32.totalorder %s134, %s136
    %p143 = scmp.eq.s32.totalorder %s21, 3
    %p144 = por %p142, %p143
    %p145 = scmp.ne.s32.totalorder %s136, %s137
    %p146 = scmp.eq.s32.totalorder %s21, 0
    %p147 = por %p145, %p146
    %p148 = scmp.ne.s32.totalorder %s136, %s137
    %p149 = scmp.eq.s32.totalorder %s22, 3
    %p150 = por %p148, %p149
    %p152 = scmp.ne.s32.totalorder %s137, %s151
    %p153 = scmp.eq.s32.totalorder %s22, 0
    %p154 = por %p152, %p153
    %s156 = sadd.s32 %s155, 1
    %p159 = scmp.eq.s32.totalorder %s16, 3
    %p160 = scmp.ne.s32.totalorder %s155, %s157
    %p161 = scmp.eq.s32.totalorder %s16, 0
    %p162 = por %p160, %p161
    %p163 = scmp.ne.s32.totalorder %s155, %s157
    %p164 = scmp.eq.s32.totalorder %s21, 3
    %p165 = por %p163, %p164
    %p166 = scmp.ne.s32.totalorder %s157, %s158
    %p167 = scmp.eq.s32.totalorder %s21, 0
    %p168 = por %p166, %p167
    %p169 = scmp.ne.s32.totalorder %s157, %s158
    %p170 = scmp.eq.s32.totalorder %s22, 3
    %p171 = por %p169, %p170
    %p173 = scmp.ne.s32.totalorder %s158, %s172
    %p174 = scmp.eq.s32.totalorder %s22, 0
    %p175 = por %p173, %p174
    %s177 = sadd.s32 %s176, 1
    %p180 = scmp.eq.s32.totalorder %s16, 3
    %p181 = scmp.ne.s32.totalorder %s176, %s178
    %p182 = scmp.eq.s32.totalorder %s16, 0
    %p183 = por %p181, %p182
    %p184 = scmp.ne.s32.totalorder %s176, %s178
    %p185 = scmp.eq.s32.totalorder %s21, 3
    %p186 = por %p184, %p185
    %p187 = scmp.ne.s32.totalorder %s178, %s179
    %p188 = scmp.eq.s32.totalorder %s21, 0
    %p189 = por %p187, %p188
    %p190 = scmp.ne.s32.totalorder %s178, %s179
    %p191 = scmp.eq.s32.totalorder %s22, 3
    %p192 = por %p190, %p191
    %p194 = scmp.ne.s32.totalorder %s179, %s193
    %p195 = scmp.eq.s32.totalorder %s22, 0
    %p196 = por %p194, %p195
    %s198 = sadd.s32 %s197, 1
    %p201 = scmp.eq.s32.totalorder %s16, 3
    %p202 = scmp.ne.s32.totalorder %s197, %s199
    %p203 = scmp.eq.s32.totalorder %s16, 0
    %p204 = por %p202, %p203
    %p205 = scmp.ne.s32.totalorder %s197, %s199
    %p206 = scmp.eq.s32.totalorder %s21, 3
    %p207 = por %p205, %p206
    %p208 = scmp.ne.s32.totalorder %s199, %s200
    %p209 = scmp.eq.s32.totalorder %s21, 0
    %p210 = por %p208, %p209
    %p211 = scmp.ne.s32.totalorder %s199, %s200
    %p212 = scmp.eq.s32.totalorder %s22, 3
    %p213 = por %p211, %p212
    %p215 = scmp.ne.s32.totalorder %s200, %s214
    %p216 = scmp.eq.s32.totalorder %s22, 0
    %p217 = por %p215, %p216
    %s219 = sadd.s32 %s218, 1
    %p222 = scmp.eq.s32.totalorder %s16, 3
    %p223 = scmp.ne.s32.totalorder %s218, %s220
    %p224 = scmp.eq.s32.totalorder %s16, 0
    %p225 = por %p223, %p224
    %p226 = scmp.ne.s32.totalorder %s218, %s220
    %p227 = scmp.eq.s32.totalorder %s21, 3
    %p228 = por %p226, %p227
    %p229 = scmp.ne.s32.totalorder %s220, %s221
    %p230 = scmp.eq.s32.totalorder %s21, 0
    %p231 = por %p229, %p230
    %p232 = scmp.ne.s32.totalorder %s220, %s221
    %p233 = scmp.eq.s32.totalorder %s22, 3
    %p234 = por %p232, %p233
    %p236 = scmp.ne.s32.totalorder %s221, %s235
    %p237 = scmp.eq.s32.totalorder %s22, 0
    %p238 = por %p236, %p237
    %s240 = sadd.s32 %s239, 1
    %p243 = scmp.eq.s32.totalorder %s16, 3
    %p244 = scmp.ne.s32.totalorder %s239, %s241
    %p245 = scmp.eq.s32.totalorder %s16, 0
    %p246 = por %p244, %p245
    %p247 = scmp.ne.s32.totalorder %s239, %s241
    %p248 = scmp.eq.s32.totalorder %s21, 3
    %p249 = por %p247, %p248
    %p250 = scmp.ne.s32.totalorder %s241, %s242
    %p251 = scmp.eq.s32.totalorder %s21, 0
    %p252 = por %p250, %p251
    %p253 = scmp.ne.s32.totalorder %s241, %s242
    %p254 = scmp.eq.s32.totalorder %s22, 3
    %p255 = por %p253, %p254
    %p257 = scmp.ne.s32.totalorder %s242, %s256
    %p258 = scmp.eq.s32.totalorder %s22, 0
    %p259 = por %p257, %p258
    %s260 = ssub.s32 %s23, %s35
    %s261 = ssub.s32 %s24, %s31
    %s262 = sor.u32 %s260, %s261
    %p263 = scmp.eq.s32.totalorder %s262, 0
    %s265 = sadd.s32 %s264, 1
    %s266 = scalar_select %p263, %s264, %s265
    %p269 = pneg %p263
    %p270 = scmp.eq.s32.totalorder %s16, 3
    %p271 = por %p269, %p270
    %p272 = scmp.ne.s32.totalorder %s264, %s267
    %p273 = scmp.eq.s32.totalorder %s16, 0
    %p274 = por %p272, %p273
    %p275 = scmp.ne.s32.totalorder %s264, %s267
    %p276 = scmp.eq.s32.totalorder %s21, 3
    %p277 = por %p275, %p276
    %p278 = scmp.ne.s32.totalorder %s267, %s268
    %p279 = scmp.eq.s32.totalorder %s21, 0
    %p280 = por %p278, %p279
    %p281 = scmp.ne.s32.totalorder %s267, %s268
    %p282 = scmp.eq.s32.totalorder %s22, 3
    %p283 = por %p281, %p282
    %p285 = scmp.ne.s32.totalorder %s268, %s284
    %p286 = scmp.eq.s32.totalorder %s22, 0
    %p287 = por %p285, %p286
    %p288 = scmp.le.s32.totalorder 1, %s16
    %p289 = scmp.lt.s32.totalorder %s16, 5
    %p290 = pnand %p288, %p289
    %p291 = pneg %p290
    // Predicated region
    $region9: #{_lambda_.1} parent=5 // pred_check
      _
    $region10: #{_lambda_.1} parent=5 // pred_check_branch
      %293 = sbr.rel (%p290) target = $region12
    $region11: #{_lambda_.1} parent=5 // pred_region
      %s294 = ssub.s32 %s16, 1
      // Predicated region
      $region13: #{_lambda_.1} parent=11 // pred_check
        %p295 = pneg %p105
      $region14: #{_lambda_.1} parent=11 // pred_check_branch
        %297 = sbr.rel (%p295) target = $region16
      $region15: #{_lambda_.1} parent=11 // pred_region
        _
      $region16: #{_lambda_.1} parent=11 // pred_fallthru
        _
      // Predicated region
      $region17: #{_lambda_.1} parent=11 // pred_check
        %p298 = pneg %p126
      $region18: #{_lambda_.1} parent=11 // pred_check_branch
        %300 = sbr.rel (%p298) target = $region20
      $region19: #{_lambda_.1} parent=11 // pred_region
        _
      $region20: #{_lambda_.1} parent=11 // pred_fallthru
        _
      // Predicated region
      $region21: #{_lambda_.1} parent=11 // pred_check
        %p301 = pneg %p147
      $region22: #{_lambda_.1} parent=11 // pred_check_branch
        %303 = sbr.rel (%p301) target = $region24
      $region23: #{_lambda_.1} parent=11 // pred_region
        _
      $region24: #{_lambda_.1} parent=11 // pred_fallthru
        _
      // Predicated region
      $region25: #{_lambda_.1} parent=11 // pred_check
        %p304 = pneg %p168
      $region26: #{_lambda_.1} parent=11 // pred_check_branch
        %306 = sbr.rel (%p304) target = $region28
      $region27: #{_lambda_.1} parent=11 // pred_region
        _
      $region28: #{_lambda_.1} parent=11 // pred_fallthru
        _
      // Predicated region
      $region29: #{_lambda_.1} parent=11 // pred_check
        %p307 = pneg %p189
      $region30: #{_lambda_.1} parent=11 // pred_check_branch
        %309 = sbr.rel (%p307) target = $region32
      $region31: #{_lambda_.1} parent=11 // pred_region
        _
      $region32: #{_lambda_.1} parent=11 // pred_fallthru
        _
      // Predicated region
      $region33: #{_lambda_.1} parent=11 // pred_check
        %p310 = pneg %p210
      $region34: #{_lambda_.1} parent=11 // pred_check_branch
        %312 = sbr.rel (%p310) target = $region36
      $region35: #{_lambda_.1} parent=11 // pred_region
        _
      $region36: #{_lambda_.1} parent=11 // pred_fallthru
        _
      // Predicated region
      $region37: #{_lambda_.1} parent=11 // pred_check
        %p313 = pneg %p231
      $region38: #{_lambda_.1} parent=11 // pred_check_branch
        %315 = sbr.rel (%p313) target = $region40
      $region39: #{_lambda_.1} parent=11 // pred_region
        _
      $region40: #{_lambda_.1} parent=11 // pred_fallthru
        _
      // Predicated region
      $region41: #{_lambda_.1} parent=11 // pred_check
        %p316 = pneg %p252
      $region42: #{_lambda_.1} parent=11 // pred_check_branch
        %318 = sbr.rel (%p316) target = $region44
      $region43: #{_lambda_.1} parent=11 // pred_region
        _
      $region44: #{_lambda_.1} parent=11 // pred_fallthru
        _
    $region12: #{_lambda_.1} parent=5 // pred_fallthru
      _
    %p319 = scmp.lt.s32.totalorder %s16, 4
    // Predicated region
    $region45: #{_lambda_.1} parent=5 // pred_check
      %p320 = pneg %p319
    $region46: #{_lambda_.1} parent=5 // pred_check_branch
      %322 = sbr.rel (%p320) target = $region48
    $region47: #{_lambda_.1} parent=5 // pred_region
      // Predicated region
      $region49: #{_lambda_.1} parent=47 // pred_check
        %p323 = pneg %p50
      $region50: #{_lambda_.1} parent=47 // pred_check_branch
        %325 = sbr.rel (%p323) target = $region52
      $region51: #{_lambda_.1} parent=47 // pred_region
        %p326 = scmp.lt.s32.totalorder %s23, 1
        %s327 = scalar_select %p326, %s23, 1
        %p328 = scmp.lt.s32.totalorder %s24, 1
        %s329 = scalar_select %p328, %s24, 1
        %s330 = smul.addr %s329, 16
        %s331 = smul.addr %s327, 32
        %s332 = sadd.s32 %s330, %s331
        %s333 = smul.addr %s332, 8
        %s334 = scalar_lea.vmem %s0, %s333
      $region52: #{_lambda_.1} parent=47 // pred_fallthru
        _
      // Predicated region
      $region53: #{_lambda_.1} parent=47 // pred_check
        %p335 = pneg %p78
      $region54: #{_lambda_.1} parent=47 // pred_check_branch
        %337 = sbr.rel (%p335) target = $region56
      $region55: #{_lambda_.1} parent=47 // pred_region
        %p338 = scmp.lt.s32.totalorder %s23, 1
        %s339 = scalar_select %p338, %s23, 1
        %p340 = scmp.lt.s32.totalorder %s24, 1
        %s341 = scalar_select %p340, %s24, 1
        %s342 = smul.addr %s341, 2
        %s343 = smul.addr %s339, 4
        %s344 = sadd.s32 %s342, %s343
        %s345 = smul.addr %s344, 8
        %s346 = scalar_lea.vmem %s1, %s345
      $region56: #{_lambda_.1} parent=47 // pred_fallthru
        _
    $region48: #{_lambda_.1} parent=5 // pred_fallthru
      _
    %p347 = scmp.le.s32.totalorder 1, %s16
    %p348 = scmp.lt.s32.totalorder %s16, 5
    %p349 = pnand %p347, %p348
    %p350 = pneg %p349
    // Predicated region
    $region57: #{_lambda_.1} parent=5 // pred_check
      _
    $region58: #{_lambda_.1} parent=5 // pred_check_branch
      %352 = sbr.rel (%p349) target = $region60
    $region59: #{_lambda_.1} parent=5 // pred_region
      %s353 = ssub.s32 %s16, 1
      %p354 = scmp.lt.s32.totalorder %s25, 1
      %s355 = scalar_select %p354, %s25, 1
      %p356 = scmp.lt.s32.totalorder %s26, 1
      %s357 = scalar_select %p356, %s26, 1
      %s358 = smul.addr %s357, 16
      %s359 = smul.addr %s355, 32
      %s360 = sadd.s32 %s358, %s359
      %s361 = smul.addr %s360, 8
      %s362 = scalar_lea.vmem %s0, %s361
      %p363 = pneg %p56
      %p364 = pneg %p53
      %p365 = scmp.lt.s32.totalorder %s25, 1
      %s366 = scalar_select %p365, %s25, 1
      %p367 = scmp.lt.s32.totalorder %s26, 1
      %s368 = scalar_select %p367, %s26, 1
      %s369 = smul.addr %s368, 2
      %s370 = smul.addr %s366, 4
      %s371 = sadd.s32 %s369, %s370
      %s372 = smul.addr %s371, 8
      %s373 = scalar_lea.vmem %s1, %s372
      %p374 = pneg %p84
      %p375 = pneg %p81
      %p376 = pneg %p105
      %p377 = pneg %p102
      %p378 = pneg %p126
      %p379 = pneg %p123
      %p380 = pneg %p147
      %p381 = pneg %p144
      %p382 = pneg %p168
      %p383 = pneg %p165
      %p384 = pneg %p189
      %p385 = pneg %p186
      %p386 = pneg %p210
      %p387 = pneg %p207
      %p388 = pneg %p231
      %p389 = pneg %p228
      %p390 = pneg %p252
      %p391 = pneg %p249
      %p392 = pneg %p280
      %p393 = pneg %p277
      %p394 = scmp.lt.s32.totalorder %s25, 1
      %s395 = scalar_select %p394, %s25, 1
      %p396 = scmp.lt.s32.totalorder %s26, 1
      %s397 = scalar_select %p396, %s26, 1
      %s398 = smul.addr %s397, 16
      %s399 = smul.addr %s395, 32
      %s400 = sadd.s32 %s398, %s399
      %s401 = smul.addr %s400, 8
      %s402 = scalar_lea.vmem %s10, %s401
      %p403 = scmp.lt.s32.totalorder %s25, 1
      %s404 = scalar_select %p403, %s25, 1
      %p405 = scmp.lt.s32.totalorder %s26, 1
      %s406 = scalar_select %p405, %s26, 1
      %s407 = smul.addr %s406, 16
      %s408 = smul.addr %s404, 32
      %s409 = sadd.s32 %s407, %s408
      %s410 = smul.addr %s409, 8
      %s411 = scalar_lea.vmem %s0, %s410
      %p412 = scmp.lt.s32.totalorder %s25, 1
      %s413 = scalar_select %p412, %s25, 1
      %p414 = scmp.lt.s32.totalorder %s26, 1
      %s415 = scalar_select %p414, %s26, 1
      %s416 = smul.addr %s415, 2
      %s417 = smul.addr %s413, 4
      %s418 = sadd.s32 %s416, %s417
      %s419 = smul.addr %s418, 8
      %s420 = scalar_lea.vmem %s1, %s419
      %p421 = scmp.lt.s32.totalorder %s25, 1
      %s422 = scalar_select %p421, %s25, 1
      %p423 = scmp.lt.s32.totalorder %s26, 1
      %s424 = scalar_select %p423, %s26, 1
      %s425 = smul.addr %s424, 16
      %s426 = smul.addr %s422, 32
      %s427 = sadd.s32 %s425, %s426
      %s428 = smul.addr %s427, 8
      %s429 = scalar_lea.vmem %s10, %s428
      %v431 = vld [vmem:[%s411] sm:$0xff]
      %v432 = vld [vmem:[%s411 + $0x8] sm:$0xff]
      %v433 = vld [vmem:[%s411 + $0x10] sm:$0xff]
      %v434 = vld [vmem:[%s411 + $0x18] sm:$0xff]
      %v435 = vld [vmem:[%s411 + $0x20] sm:$0xff]
      %v436 = vld [vmem:[%s411 + $0x28] sm:$0xff]
      %v437 = vld [vmem:[%s411 + $0x30] sm:$0xff]
      %v438 = vld [vmem:[%s411 + $0x38] sm:$0xff]
      %v439 = vld [vmem:[%s411 + $0x40] sm:$0xff]
      %v440 = vld [vmem:[%s411 + $0x48] sm:$0xff]
      %v441 = vld [vmem:[%s411 + $0x50] sm:$0xff]
      %v442 = vld [vmem:[%s411 + $0x58] sm:$0xff]
      %v443 = vld [vmem:[%s411 + $0x60] sm:$0xff]
      %v444 = vld [vmem:[%s411 + $0x68] sm:$0xff]
      %v445 = vld [vmem:[%s411 + $0x70] sm:$0xff]
      %v446 = vld [vmem:[%s411 + $0x78] sm:$0xff]
      %v447 = vld [vmem:[%s420] sm:$0xff]
      %v448 = vld [vmem:[%s420 + $0x8] sm:$0xff]
      %v449 = vpack.c.bf16 %v432, %v431
      %v450 = vpack.c.bf16 %v434, %v433
      %v451 = vpack.c.bf16 %v436, %v435
      %v452 = vpack.c.bf16 %v438, %v437
      %v453 = vpack.c.bf16 %v440, %v439
      %v454 = vpack.c.bf16 %v442, %v441
      %v455 = vpack.c.bf16 %v444, %v443
      %v456 = vpack.c.bf16 %v446, %v445
      %v457 = vpack.c.bf16 %v448, %v447
      %v458 = vpack.c.bf16 0.0, 0.0
      %v459 = vld [vmem:[%s2] sm:$0x3]
      %v460 = vld [vmem:[%s3] sm:$0x1]
      %v462 = vlaneseq
      %v463 = vshrl.u32 %v462, 7
      %v464 = vsub.s32 0, %v463
      %v465 = vrot.slane %v460, %v464
      %vm467 = vcmask 31744
      %v469 = vsel %vm467, %v449, 0
      %v472 = vsel %vm467, %v450, 0
      %v475 = vsel %vm467, %v451, 0
      %v478 = vsel %vm467, %v452, 0
      %v481 = vsel %vm467, %v453, 0
      %v484 = vsel %vm467, %v454, 0
      %v487 = vsel %vm467, %v455, 0
      %v490 = vsel %vm467, %v456, 0
      %v493 = vsel %vm467, %v457, 0
      %v496 = vsel %vm467, %v458, 0
      %vm498 = vcmask 1041408
      %v500 = vsel %vm498, %v459, 0
      %502 = vmatprep.subr.bf16.mxu0 0
      %503 = vmatpush1.bf16.msra.mxu0 %v500
      %504 = vmatprep.subr.bf16.mxu0 0
      %505 = vmatpush1.bf16.msra.mxu0 0
      %506 = vmatprep.subr.bf16.mxu0 0
      %507 = vmatpush1.bf16.msra.mxu0 0
      %508 = vmatprep.subr.bf16.mxu0 0
      %509 = vmatpush1.bf16.msra.mxu0 0
      %510 = vmatprep.subr.bf16.mxu0 0
      %511 = vmatpush1.bf16.msra.mxu0 0
      %512 = vmatprep.subr.bf16.mxu0 0
      %513 = vmatpush1.bf16.msra.mxu0 0
      %514 = vmatprep.subr.bf16.mxu0 0
      %515 = vmatpush1.bf16.msra.mxu0 0
      %516 = vmatprep.subr.bf16.mxu0 0
      %517 = vmatpush1.bf16.msra.mxu0 0
      %518 = vmatprep.subr.bf16.mxu0 0
      %519 = vmatpush1.bf16.msra.mxu0 0
      %520 = vmatprep.subr.bf16.mxu0 0
      %521 = vmatpush1.bf16.msra.mxu0 0
      %522 = vmatprep.subr.bf16.mxu0 0
      %523 = vmatpush1.bf16.msra.mxu0 0
      %524 = vmatprep.subr.bf16.mxu0 0
      %525 = vmatpush1.bf16.msra.mxu0 0
      %526 = vmatprep.subr.bf16.mxu0 0
      %527 = vmatpush1.bf16.msra.mxu0 0
      %528 = vmatprep.subr.bf16.mxu0 0
      %529 = vmatpush1.bf16.msra.mxu0 0
      %530 = vmatprep.subr.bf16.mxu0 0
      %531 = vmatpush1.bf16.msra.mxu0 0
      %532 = vmatprep.subr.bf16.mxu0 0
      %533 = vmatpush1.bf16.msra.mxu0 0
      %534 = vmatprep.mubr.bf16.mxu0 0
      %535 = vmatmul.mubr.bf16.gmra.mrb[0].mxu0 %v469
      %v536 = vpop.f32.mrb[0].mxu0
      %v537 = vadd.f32 %v465, %v536
      %v538 = vpop.f32.mrb[0].mxu0
      %v539 = vpop.f32.mrb[0].mxu0
      %v540 = vadd.f32 %v465, %v539
      %v541 = vpop.f32.mrb[0].mxu0
      %542 = vmatprep.mubr.bf16.mxu0 0
      %543 = vmatmul.mubr.bf16.gmra.mrb[0].mxu0 %v472
      %v544 = vpop.f32.mrb[0].mxu0
      %v545 = vadd.f32 %v465, %v544
      %v546 = vpop.f32.mrb[0].mxu0
      %v547 = vpop.f32.mrb[0].mxu0
      %v548 = vadd.f32 %v465, %v547
      %v549 = vpop.f32.mrb[0].mxu0
      %550 = vmatprep.mubr.bf16.mxu0 0
      %551 = vmatmul.mubr.bf16.gmra.mrb[0].mxu0 %v475
      %v552 = vpop.f32.mrb[0].mxu0
      %v553 = vadd.f32 %v465, %v552
      %v554 = vpop.f32.mrb[0].mxu0
      %v555 = vpop.f32.mrb[0].mxu0
      %v556 = vadd.f32 %v465, %v555
      %v557 = vpop.f32.mrb[0].mxu0
      %558 = vmatprep.mubr.bf16.mxu0 0
      %559 = vmatmul.mubr.bf16.gmra.mrb[0].mxu0 %v478
      %v560 = vpop.f32.mrb[0].mxu0
      %v561 = vadd.f32 %v465, %v560
      %v562 = vpop.f32.mrb[0].mxu0
      %v563 = vpop.f32.mrb[0].mxu0
      %v564 = vadd.f32 %v465, %v563
      %v565 = vpop.f32.mrb[0].mxu0
      %566 = vmatprep.mubr.bf16.mxu0 0
      %567 = vmatmul.mubr.bf16.gmra.mrb[0].mxu0 %v481
      %v568 = vpop.f32.mrb[0].mxu0
      %v569 = vadd.f32 %v465, %v568
      %v570 = vpop.f32.mrb[0].mxu0
      %v571 = vpop.f32.mrb[0].mxu0
      %v572 = vadd.f32 %v465, %v571
      %v573 = vpop.f32.mrb[0].mxu0
      %574 = vmatprep.mubr.bf16.mxu0 0
      %575 = vmatmul.mubr.bf16.gmra.mrb[0].mxu0 %v484
      %v576 = vpop.f32.mrb[0].mxu0
      %v577 = vadd.f32 %v465, %v576
      %v578 = vpop.f32.mrb[0].mxu0
      %v579 = vpop.f32.mrb[0].mxu0
      %v580 = vadd.f32 %v465, %v579
      %v581 = vpop.f32.mrb[0].mxu0
      %582 = vmatprep.mubr.bf16.mxu0 0
      %583 = vmatmul.mubr.bf16.gmra.mrb[0].mxu0 %v487
      %v584 = vpop.f32.mrb[0].mxu0
      %v585 = vadd.f32 %v465, %v584
      %v586 = vpop.f32.mrb[0].mxu0
      %v587 = vpop.f32.mrb[0].mxu0
      %v588 = vadd.f32 %v465, %v587
      %v589 = vpop.f32.mrb[0].mxu0
      %590 = vmatprep.mubr.bf16.mxu0 0
      %591 = vmatmul.mubr.bf16.gmra.mrb[0].mxu0 %v490
      %v592 = vpop.f32.mrb[0].mxu0
      %v593 = vadd.f32 %v465, %v592
      %v594 = vpop.f32.mrb[0].mxu0
      %v595 = vpop.f32.mrb[0].mxu0
      %v596 = vadd.f32 %v465, %v595
      %v597 = vpop.f32.mrb[0].mxu0
      %598 = vmatprep.mubr.bf16.mxu0 0
      %599 = vmatmul.mubr.bf16.gmra.mrb[0].mxu0 %v493
      %v600 = vpop.f32.mrb[0].mxu0
      %v601 = vadd.f32 %v465, %v600
      %v602 = vpop.f32.mrb[0].mxu0
      %v603 = vpop.f32.mrb[0].mxu0
      %v604 = vadd.f32 %v465, %v603
      %v605 = vpop.f32.mrb[0].mxu0
      %606 = vmatprep.mubr.bf16.mxu0 0
      %607 = vmatmul.mubr.bf16.gmra.mrb[0].mxu0 %v496
      %v608 = vpop.f32.mrb[0].mxu0
      %v609 = vadd.f32 %v465, %v608
      %v610 = vpop.f32.mrb[0].mxu0
      %v611 = vpop.f32.mrb[0].mxu0
      %v612 = vpop.f32.mrb[0].mxu0
      %613 = vdwg.mxu0
      %vm614 = vcmp.ge.f32.partialorder %v537, 0.0
      %vm615 = vcmp.ge.f32.partialorder %v540, 0.0
      %vm616 = vcmp.ge.f32.partialorder %v545, 0.0
      %vm617 = vcmp.ge.f32.partialorder %v548, 0.0
      %vm618 = vcmp.ge.f32.partialorder %v553, 0.0
      %vm619 = vcmp.ge.f32.partialorder %v556, 0.0
      %vm620 = vcmp.ge.f32.partialorder %v561, 0.0
      %vm621 = vcmp.ge.f32.partialorder %v564, 0.0
      %vm622 = vcmp.ge.f32.partialorder %v569, 0.0
      %vm623 = vcmp.ge.f32.partialorder %v572, 0.0
      %vm624 = vcmp.ge.f32.partialorder %v577, 0.0
      %vm625 = vcmp.ge.f32.partialorder %v580, 0.0
      %vm626 = vcmp.ge.f32.partialorder %v585, 0.0
      %vm627 = vcmp.ge.f32.partialorder %v588, 0.0
      %vm628 = vcmp.ge.f32.partialorder %v593, 0.0
      %vm629 = vcmp.ge.f32.partialorder %v596, 0.0
      %vm630 = vcmp.ge.f32.partialorder %v601, 0.0
      %vm631 = vcmp.ge.f32.partialorder %v604, 0.0
      %vm632 = vcmp.ge.f32.partialorder %v609, 0.0
      %v633 = vmul.f32 %v537, 0.01
      %v634 = vmul.f32 %v540, 0.01
      %v635 = vmul.f32 %v545, 0.01
      %v636 = vmul.f32 %v548, 0.01
      %v637 = vmul.f32 %v553, 0.01
      %v638 = vmul.f32 %v556, 0.01
      %v639 = vmul.f32 %v561, 0.01
      %v640 = vmul.f32 %v564, 0.01
      %v641 = vmul.f32 %v569, 0.01
      %v642 = vmul.f32 %v572, 0.01
      %v643 = vmul.f32 %v577, 0.01
      %v644 = vmul.f32 %v580, 0.01
      %v645 = vmul.f32 %v585, 0.01
      %v646 = vmul.f32 %v588, 0.01
      %v647 = vmul.f32 %v593, 0.01
      %v648 = vmul.f32 %v596, 0.01
      %v649 = vmul.f32 %v601, 0.01
      %v650 = vmul.f32 %v604, 0.01
      %v651 = vmul.f32 %v609, 0.01
      %v652 = vsel %vm614, %v537, %v633
      %v653 = vsel %vm615, %v540, %v634
      %v654 = vsel %vm616, %v545, %v635
      %v655 = vsel %vm617, %v548, %v636
      %v656 = vsel %vm618, %v553, %v637
      %v657 = vsel %vm619, %v556, %v638
      %v658 = vsel %vm620, %v561, %v639
      %v659 = vsel %vm621, %v564, %v640
      %v660 = vsel %vm622, %v569, %v641
      %v661 = vsel %vm623, %v572, %v642
      %v662 = vsel %vm624, %v577, %v643
      %v663 = vsel %vm625, %v580, %v644
      %v664 = vsel %vm626, %v585, %v645
      %v665 = vsel %vm627, %v588, %v646
      %v666 = vsel %vm628, %v593, %v647
      %v667 = vsel %vm629, %v596, %v648
      %v668 = vsel %vm630, %v601, %v649
      %v669 = vsel %vm631, %v604, %v650
      %v670 = vsel %vm632, %v609, %v651
      %v671 = vlaneseq
      %v672 = vshrl.u32 %v671, 7
      %v673 = vadd.s32 %v672, 8
      %v674 = vadd.s32 %v672, 16
      %v675 = vadd.s32 %v672, 24
      %v676 = vadd.s32 %v672, 32
      %v677 = vadd.s32 %v672, 40
      %v678 = vadd.s32 %v672, 48
      %v679 = vadd.s32 %v672, 56
      %v680 = vadd.s32 %v672, 64
      %v681 = vadd.s32 %v672, 72
      %v682 = vadd.s32 %v672, 80
      %v683 = vadd.s32 %v672, 88
      %v684 = vadd.s32 %v672, 96
      %v685 = vadd.s32 %v672, 104
      %v686 = vadd.s32 %v672, 112
      %v687 = vadd.s32 %v672, 120
      %vm688 = vcmp.lt.s32.totalorder %v672, 0
      %v689 = vsub.s32 0, %v672
      %v690 = vsel %vm688, %v689, %v672
      %v691 = vshrl.u32 %v690, 4
      %v692 = vand.u32 %v690, 15
      %v693 = vsub.s32 0, %v692
      %v694 = vsel %vm688, %v693, %v692
      %vm695 = vcmp.lt.s32.totalorder %v673, 0
      %v696 = vsub.s32 0, %v673
      %v697 = vsel %vm695, %v696, %v673
      %v698 = vshrl.u32 %v697, 4
      %v699 = vand.u32 %v697, 15
      %v700 = vsub.s32 0, %v699
      %v701 = vsel %vm695, %v700, %v699
      %vm702 = vcmp.lt.s32.totalorder %v674, 0
      %v703 = vsub.s32 0, %v674
      %v704 = vsel %vm702, %v703, %v674
      %v705 = vshrl.u32 %v704, 4
      %v706 = vand.u32 %v704, 15
      %v707 = vsub.s32 0, %v706
      %v708 = vsel %vm702, %v707, %v706
      %vm709 = vcmp.lt.s32.totalorder %v675, 0
      %v710 = vsub.s32 0, %v675
      %v711 = vsel %vm709, %v710, %v675
      %v712 = vshrl.u32 %v711, 4
      %v713 = vand.u32 %v711, 15
      %v714 = vsub.s32 0, %v713
      %v715 = vsel %vm709, %v714, %v713
      %vm716 = vcmp.lt.s32.totalorder %v676, 0
      %v717 = vsub.s32 0, %v676
      %v718 = vsel %vm716, %v717, %v676
      %v719 = vshrl.u32 %v718, 4
      %v720 = vand.u32 %v718, 15
      %v721 = vsub.s32 0, %v720
      %v722 = vsel %vm716, %v721, %v720
      %vm723 = vcmp.lt.s32.totalorder %v677, 0
      %v724 = vsub.s32 0, %v677
      %v725 = vsel %vm723, %v724, %v677
      %v726 = vshrl.u32 %v725, 4
      %v727 = vand.u32 %v725, 15
      %v728 = vsub.s32 0, %v727
      %v729 = vsel %vm723, %v728, %v727
      %vm730 = vcmp.lt.s32.totalorder %v678, 0
      %v731 = vsub.s32 0, %v678
      %v732 = vsel %vm730, %v731, %v678
      %v733 = vshrl.u32 %v732, 4
      %v734 = vand.u32 %v732, 15
      %v735 = vsub.s32 0, %v734
      %v736 = vsel %vm730, %v735, %v734
      %vm737 = vcmp.lt.s32.totalorder %v679, 0
      %v738 = vsub.s32 0, %v679
      %v739 = vsel %vm737, %v738, %v679
      %v740 = vshrl.u32 %v739, 4
      %v741 = vand.u32 %v739, 15
      %v742 = vsub.s32 0, %v741
      %v743 = vsel %vm737, %v742, %v741
      %vm744 = vcmp.lt.s32.totalorder %v680, 0
      %v745 = vsub.s32 0, %v680
      %v746 = vsel %vm744, %v745, %v680
      %v747 = vshrl.u32 %v746, 4
      %v748 = vand.u32 %v746, 15
      %v749 = vsub.s32 0, %v748
      %v750 = vsel %vm744, %v749, %v748
      %vm751 = vcmp.lt.s32.totalorder %v681, 0
      %v752 = vsub.s32 0, %v681
      %v753 = vsel %vm751, %v752, %v681
      %v754 = vshrl.u32 %v753, 4
      %v755 = vand.u32 %v753, 15
      %v756 = vsub.s32 0, %v755
      %v757 = vsel %vm751, %v756, %v755
      %vm758 = vcmp.lt.s32.totalorder %v682, 0
      %v759 = vsub.s32 0, %v682
      %v760 = vsel %vm758, %v759, %v682
      %v761 = vshrl.u32 %v760, 4
      %v762 = vand.u32 %v760, 15
      %v763 = vsub.s32 0, %v762
      %v764 = vsel %vm758, %v763, %v762
      %vm765 = vcmp.lt.s32.totalorder %v683, 0
      %v766 = vsub.s32 0, %v683
      %v767 = vsel %vm765, %v766, %v683
      %v768 = vshrl.u32 %v767, 4
      %v769 = vand.u32 %v767, 15
      %v770 = vsub.s32 0, %v769
      %v771 = vsel %vm765, %v770, %v769
      %vm772 = vcmp.lt.s32.totalorder %v684, 0
      %v773 = vsub.s32 0, %v684
      %v774 = vsel %vm772, %v773, %v684
      %v775 = vshrl.u32 %v774, 4
      %v776 = vand.u32 %v774, 15
      %v777 = vsub.s32 0, %v776
      %v778 = vsel %vm772, %v777, %v776
      %vm779 = vcmp.lt.s32.totalorder %v685, 0
      %v780 = vsub.s32 0, %v685
      %v781 = vsel %vm779, %v780, %v685
      %v782 = vshrl.u32 %v781, 4
      %v783 = vand.u32 %v781, 15
      %v784 = vsub.s32 0, %v783
      %v785 = vsel %vm779, %v784, %v783
      %vm786 = vcmp.lt.s32.totalorder %v686, 0
      %v787 = vsub.s32 0, %v686
      %v788 = vsel %vm786, %v787, %v686
      %v789 = vshrl.u32 %v788, 4
      %v790 = vand.u32 %v788, 15
      %v791 = vsub.s32 0, %v790
      %v792 = vsel %vm786, %v791, %v790
      %vm793 = vcmp.lt.s32.totalorder %v687, 0
      %v794 = vsub.s32 0, %v687
      %v795 = vsel %vm793, %v794, %v687
      %v796 = vshrl.u32 %v795, 4
      %v797 = vand.u32 %v795, 15
      %v798 = vsub.s32 0, %v797
      %v799 = vsel %vm793, %v798, %v797
      %vm800 = vcmp.ne.s32.totalorder %v694, 0
      %vm801 = vcmp.ne.s32.totalorder %v701, 0
      %vm802 = vcmp.ne.s32.totalorder %v708, 0
      %vm803 = vcmp.ne.s32.totalorder %v715, 0
      %vm804 = vcmp.ne.s32.totalorder %v722, 0
      %vm805 = vcmp.ne.s32.totalorder %v729, 0
      %vm806 = vcmp.ne.s32.totalorder %v736, 0
      %vm807 = vcmp.ne.s32.totalorder %v743, 0
      %vm808 = vcmp.ne.s32.totalorder %v750, 0
      %vm809 = vcmp.ne.s32.totalorder %v757, 0
      %vm810 = vcmp.ne.s32.totalorder %v764, 0
      %vm811 = vcmp.ne.s32.totalorder %v771, 0
      %vm812 = vcmp.ne.s32.totalorder %v778, 0
      %vm813 = vcmp.ne.s32.totalorder %v785, 0
      %vm814 = vcmp.ne.s32.totalorder %v792, 0
      %vm815 = vcmp.ne.s32.totalorder %v799, 0
      %vm816 = vcmp.lt.s32.totalorder %v694, 0
      %vm817 = vcmp.lt.s32.totalorder %v701, 0
      %vm818 = vcmp.lt.s32.totalorder %v708, 0
      %vm819 = vcmp.lt.s32.totalorder %v715, 0
      %vm820 = vcmp.lt.s32.totalorder %v722, 0
      %vm821 = vcmp.lt.s32.totalorder %v729, 0
      %vm822 = vcmp.lt.s32.totalorder %v736, 0
      %vm823 = vcmp.lt.s32.totalorder %v743, 0
      %vm824 = vcmp.lt.s32.totalorder %v750, 0
      %vm825 = vcmp.lt.s32.totalorder %v757, 0
      %vm826 = vcmp.lt.s32.totalorder %v764, 0
      %vm827 = vcmp.lt.s32.totalorder %v771, 0
      %vm828 = vcmp.lt.s32.totalorder %v778, 0
      %vm829 = vcmp.lt.s32.totalorder %v785, 0
      %vm830 = vcmp.lt.s32.totalorder %v792, 0
      %vm831 = vcmp.lt.s32.totalorder %v799, 0
      %vm832 = vmand %vm816, %vm800
      %vm833 = vmand %vm817, %vm801
      %vm834 = vmand %vm818, %vm802
      %vm835 = vmand %vm819, %vm803
      %vm836 = vmand %vm820, %vm804
      %vm837 = vmand %vm821, %vm805
      %vm838 = vmand %vm822, %vm806
      %vm839 = vmand %vm823, %vm807
      %vm840 = vmand %vm824, %vm808
      %vm841 = vmand %vm825, %vm809
      %vm842 = vmand %vm826, %vm810
      %vm843 = vmand %vm827, %vm811
      %vm844 = vmand %vm828, %vm812
      %vm845 = vmand %vm829, %vm813
      %vm846 = vmand %vm830, %vm814
      %vm847 = vmand %vm831, %vm815
      %v848 = vadd.s32 %v694, 16
      %v849 = vadd.s32 %v701, 16
      %v850 = vadd.s32 %v708, 16
      %v851 = vadd.s32 %v715, 16
      %v852 = vadd.s32 %v722, 16
      %v853 = vadd.s32 %v729, 16
      %v854 = vadd.s32 %v736, 16
      %v855 = vadd.s32 %v743, 16
      %v856 = vadd.s32 %v750, 16
      %v857 = vadd.s32 %v757, 16
      %v858 = vadd.s32 %v764, 16
      %v859 = vadd.s32 %v771, 16
      %v860 = vadd.s32 %v778, 16
      %v861 = vadd.s32 %v785, 16
      %v862 = vadd.s32 %v792, 16
      %v863 = vadd.s32 %v799, 16
      %v864 = vsel %vm832, %v848, %v694
      %v865 = vsel %vm833, %v849, %v701
      %v866 = vsel %vm834, %v850, %v708
      %v867 = vsel %vm835, %v851, %v715
      %v868 = vsel %vm836, %v852, %v722
      %v869 = vsel %vm837, %v853, %v729
      %v870 = vsel %vm838, %v854, %v736
      %v871 = vsel %vm839, %v855, %v743
      %v872 = vsel %vm840, %v856, %v750
      %v873 = vsel %vm841, %v857, %v757
      %v874 = vsel %vm842, %v858, %v764
      %v875 = vsel %vm843, %v859, %v771
      %v876 = vsel %vm844, %v860, %v778
      %v877 = vsel %vm845, %v861, %v785
      %v878 = vsel %vm846, %v862, %v792
      %v879 = vsel %vm847, %v863, %v799
      %vm880 = vcmp.lt.s32.totalorder %v864, 15
      %vm881 = vcmp.lt.s32.totalorder %v865, 15
      %vm882 = vcmp.lt.s32.totalorder %v866, 15
      %vm883 = vcmp.lt.s32.totalorder %v867, 15
      %vm884 = vcmp.lt.s32.totalorder %v868, 15
      %vm885 = vcmp.lt.s32.totalorder %v869, 15
      %vm886 = vcmp.lt.s32.totalorder %v870, 15
      %vm887 = vcmp.lt.s32.totalorder %v871, 15
      %vm888 = vcmp.lt.s32.totalorder %v872, 15
      %vm889 = vcmp.lt.s32.totalorder %v873, 15
      %vm890 = vcmp.lt.s32.totalorder %v874, 15
      %vm891 = vcmp.lt.s32.totalorder %v875, 15
      %vm892 = vcmp.lt.s32.totalorder %v876, 15
      %vm893 = vcmp.lt.s32.totalorder %v877, 15
      %vm894 = vcmp.lt.s32.totalorder %v878, 15
      %vm895 = vcmp.lt.s32.totalorder %v879, 15
      %p896 = scmp.lt.s32.totalorder %s26, 1
      %s897 = scalar_select %p896, 128, 112
      %v898 = vstv %s897
      %vm899 = vcmp.lt.s32.totalorder %v672, %v898
      %vm900 = vcmp.lt.s32.totalorder %v673, %v898
      %vm901 = vcmp.lt.s32.totalorder %v674, %v898
      %vm902 = vcmp.lt.s32.totalorder %v675, %v898
      %vm903 = vcmp.lt.s32.totalorder %v676, %v898
      %vm904 = vcmp.lt.s32.totalorder %v677, %v898
      %vm905 = vcmp.lt.s32.totalorder %v678, %v898
      %vm906 = vcmp.lt.s32.totalorder %v679, %v898
      %vm907 = vcmp.lt.s32.totalorder %v680, %v898
      %vm908 = vcmp.lt.s32.totalorder %v681, %v898
      %vm909 = vcmp.lt.s32.totalorder %v682, %v898
      %vm910 = vcmp.lt.s32.totalorder %v683, %v898
      %vm911 = vcmp.lt.s32.totalorder %v684, %v898
      %vm912 = vcmp.lt.s32.totalorder %v685, %v898
      %vm913 = vcmp.lt.s32.totalorder %v686, %v898
      %vm914 = vcmp.lt.s32.totalorder %v687, %v898
      %v915 = vpack.c.bf16 %v653, %v652
      %v916 = vpack.c.bf16 %v655, %v654
      %v917 = vpack.c.bf16 %v657, %v656
      %v918 = vpack.c.bf16 %v659, %v658
      %v919 = vpack.c.bf16 %v661, %v660
      %v920 = vpack.c.bf16 %v663, %v662
      %v921 = vpack.c.bf16 %v665, %v664
      %v922 = vpack.c.bf16 %v667, %v666
      %v923 = vsel %vm880, 1, 0
      %v924 = vsel %vm881, 1, 0
      %v925 = vsel %vm882, 1, 0
      %v926 = vsel %vm883, 1, 0
      %v927 = vsel %vm884, 1, 0
      %v928 = vsel %vm885, 1, 0
      %v929 = vsel %vm886, 1, 0
      %v930 = vsel %vm887, 1, 0
      %v931 = vsel %vm888, 1, 0
      %v932 = vsel %vm889, 1, 0
      %v933 = vsel %vm890, 1, 0
      %v934 = vsel %vm891, 1, 0
      %v935 = vsel %vm892, 1, 0
      %v936 = vsel %vm893, 1, 0
      %v937 = vsel %vm894, 1, 0
      %v938 = vsel %vm895, 1, 0
      %vm939 = vcmp.eq.s32.totalorder %v923, 1
      %vm940 = vcmp.eq.s32.totalorder %v924, 1
      %vm941 = vcmp.eq.s32.totalorder %v925, 1
      %vm942 = vcmp.eq.s32.totalorder %v926, 1
      %vm943 = vcmp.eq.s32.totalorder %v927, 1
      %vm944 = vcmp.eq.s32.totalorder %v928, 1
      %vm945 = vcmp.eq.s32.totalorder %v929, 1
      %vm946 = vcmp.eq.s32.totalorder %v930, 1
      %vm947 = vcmp.eq.s32.totalorder %v931, 1
      %vm948 = vcmp.eq.s32.totalorder %v932, 1
      %vm949 = vcmp.eq.s32.totalorder %v933, 1
      %vm950 = vcmp.eq.s32.totalorder %v934, 1
      %vm951 = vcmp.eq.s32.totalorder %v935, 1
      %vm952 = vcmp.eq.s32.totalorder %v936, 1
      %vm953 = vcmp.eq.s32.totalorder %v937, 1
      %vm954 = vcmp.eq.s32.totalorder %v938, 1
      %vm972 = vcmask 1046528
      %v973 = vrot.slane %v652, 1
      %v974 = vrot.slane %v653, 1
      %v975 = vsel %vm972, %v973, %v974
      %v976 = vrot.slane %v654, 1
      %v977 = vsel %vm972, %v974, %v976
      %v978 = vrot.slane %v655, 1
      %v979 = vsel %vm972, %v976, %v978
      %v980 = vrot.slane %v656, 1
      %v981 = vsel %vm972, %v978, %v980
      %v982 = vrot.slane %v657, 1
      %v983 = vsel %vm972, %v980, %v982
      %v984 = vrot.slane %v658, 1
      %v985 = vsel %vm972, %v982, %v984
      %v986 = vrot.slane %v659, 1
      %v987 = vsel %vm972, %v984, %v986
      %v988 = vrot.slane %v660, 1
      %v989 = vsel %vm972, %v986, %v988
      %v990 = vrot.slane %v661, 1
      %v991 = vsel %vm972, %v988, %v990
      %v992 = vrot.slane %v662, 1
      %v993 = vsel %vm972, %v990, %v992
      %v994 = vrot.slane %v663, 1
      %v995 = vsel %vm972, %v992, %v994
      %v996 = vrot.slane %v664, 1
      %v997 = vsel %vm972, %v994, %v996
      %v998 = vrot.slane %v665, 1
      %v999 = vsel %vm972, %v996, %v998
      %v1000 = vrot.slane %v666, 1
      %v1001 = vsel %vm972, %v998, %v1000
      %v1002 = vrot.slane %v667, 1
      %v1003 = vsel %vm972, %v1000, %v1002
      %v1004 = vrot.slane %v668, 1
      %v1005 = vsel %vm972, %v1002, %v1004
      %v1022 = vsel %vm939, %v975, 0.0
      %v1023 = vsel %vm940, %v977, 0.0
      %v1024 = vsel %vm941, %v979, 0.0
      %v1025 = vsel %vm942, %v981, 0.0
      %v1026 = vsel %vm943, %v983, 0.0
      %v1027 = vsel %vm944, %v985, 0.0
      %v1028 = vsel %vm945, %v987, 0.0
      %v1029 = vsel %vm946, %v989, 0.0
      %v1030 = vsel %vm947, %v991, 0.0
      %v1031 = vsel %vm948, %v993, 0.0
      %v1032 = vsel %vm949, %v995, 0.0
      %v1033 = vsel %vm950, %v997, 0.0
      %v1034 = vsel %vm951, %v999, 0.0
      %v1035 = vsel %vm952, %v1001, 0.0
      %v1036 = vsel %vm953, %v1003, 0.0
      %v1037 = vsel %vm954, %v1005, 0.0
      %v1038 = vpack.c.bf16 %v1023, %v1022
      %v1039 = vpack.c.bf16 %v1025, %v1024
      %v1040 = vpack.c.bf16 %v1027, %v1026
      %v1041 = vpack.c.bf16 %v1029, %v1028
      %v1042 = vpack.c.bf16 %v1031, %v1030
      %v1043 = vpack.c.bf16 %v1033, %v1032
      %v1044 = vpack.c.bf16 %v1035, %v1034
      %v1045 = vpack.c.bf16 %v1037, %v1036
      %v1046 = vsel %vm899, 1, 0
      %v1047 = vsel %vm900, 1, 0
      %v1048 = vsel %vm901, 1, 0
      %v1049 = vsel %vm902, 1, 0
      %v1050 = vsel %vm903, 1, 0
      %v1051 = vsel %vm904, 1, 0
      %v1052 = vsel %vm905, 1, 0
      %v1053 = vsel %vm906, 1, 0
      %v1054 = vsel %vm907, 1, 0
      %v1055 = vsel %vm908, 1, 0
      %v1056 = vsel %vm909, 1, 0
      %v1057 = vsel %vm910, 1, 0
      %v1058 = vsel %vm911, 1, 0
      %v1059 = vsel %vm912, 1, 0
      %v1060 = vsel %vm913, 1, 0
      %v1061 = vsel %vm914, 1, 0
      %vm1062 = vcmp.eq.s32.totalorder %v1046, 1
      %vm1063 = vcmp.eq.s32.totalorder %v1047, 1
      %vm1064 = vcmp.eq.s32.totalorder %v1048, 1
      %vm1065 = vcmp.eq.s32.totalorder %v1049, 1
      %vm1066 = vcmp.eq.s32.totalorder %v1050, 1
      %vm1067 = vcmp.eq.s32.totalorder %v1051, 1
      %vm1068 = vcmp.eq.s32.totalorder %v1052, 1
      %vm1069 = vcmp.eq.s32.totalorder %v1053, 1
      %vm1070 = vcmp.eq.s32.totalorder %v1054, 1
      %vm1071 = vcmp.eq.s32.totalorder %v1055, 1
      %vm1072 = vcmp.eq.s32.totalorder %v1056, 1
      %vm1073 = vcmp.eq.s32.totalorder %v1057, 1
      %vm1074 = vcmp.eq.s32.totalorder %v1058, 1
      %vm1075 = vcmp.eq.s32.totalorder %v1059, 1
      %vm1076 = vcmp.eq.s32.totalorder %v1060, 1
      %vm1077 = vcmp.eq.s32.totalorder %v1061, 1
      %v1078 = vsel %vm1062, %v654, 0.0
      %v1079 = vsel %vm1063, %v655, 0.0
      %v1080 = vsel %vm1064, %v656, 0.0
      %v1081 = vsel %vm1065, %v657, 0.0
      %v1082 = vsel %vm1066, %v658, 0.0
      %v1083 = vsel %vm1067, %v659, 0.0
      %v1084 = vsel %vm1068, %v660, 0.0
      %v1085 = vsel %vm1069, %v661, 0.0
      %v1086 = vsel %vm1070, %v662, 0.0
      %v1087 = vsel %vm1071, %v663, 0.0
      %v1088 = vsel %vm1072, %v664, 0.0
      %v1089 = vsel %vm1073, %v665, 0.0
      %v1090 = vsel %vm1074, %v666, 0.0
      %v1091 = vsel %vm1075, %v667, 0.0
      %v1092 = vsel %vm1076, %v668, 0.0
      %v1093 = vsel %vm1077, %v669, 0.0
      %v1094 = vpack.c.bf16 %v1079, %v1078
      %v1095 = vpack.c.bf16 %v1081, %v1080
      %v1096 = vpack.c.bf16 %v1083, %v1082
      %v1097 = vpack.c.bf16 %v1085, %v1084
      %v1098 = vpack.c.bf16 %v1087, %v1086
      %v1099 = vpack.c.bf16 %v1089, %v1088
      %v1100 = vpack.c.bf16 %v1091, %v1090
      %v1101 = vpack.c.bf16 %v1093, %v1092
      %vm1102 = vmand %vm880, %vm899
      %vm1103 = vmand %vm881, %vm900
      %vm1104 = vmand %vm882, %vm901
      %vm1105 = vmand %vm883, %vm902
      %vm1106 = vmand %vm884, %vm903
      %vm1107 = vmand %vm885, %vm904
      %vm1108 = vmand %vm886, %vm905
      %vm1109 = vmand %vm887, %vm906
      %vm1110 = vmand %vm888, %vm907
      %vm1111 = vmand %vm889, %vm908
      %vm1112 = vmand %vm890, %vm909
      %vm1113 = vmand %vm891, %vm910
      %vm1114 = vmand %vm892, %vm911
      %vm1115 = vmand %vm893, %vm912
      %vm1116 = vmand %vm894, %vm913
      %vm1117 = vmand %vm895, %vm914
      %v1118 = vsel %vm1102, 1, 0
      %v1119 = vsel %vm1103, 1, 0
      %v1120 = vsel %vm1104, 1, 0
      %v1121 = vsel %vm1105, 1, 0
      %v1122 = vsel %vm1106, 1, 0
      %v1123 = vsel %vm1107, 1, 0
      %v1124 = vsel %vm1108, 1, 0
      %v1125 = vsel %vm1109, 1, 0
      %v1126 = vsel %vm1110, 1, 0
      %v1127 = vsel %vm1111, 1, 0
      %v1128 = vsel %vm1112, 1, 0
      %v1129 = vsel %vm1113, 1, 0
      %v1130 = vsel %vm1114, 1, 0
      %v1131 = vsel %vm1115, 1, 0
      %v1132 = vsel %vm1116, 1, 0
      %v1133 = vsel %vm1117, 1, 0
      %vm1134 = vcmp.eq.s32.totalorder %v1118, 1
      %vm1135 = vcmp.eq.s32.totalorder %v1119, 1
      %vm1136 = vcmp.eq.s32.totalorder %v1120, 1
      %vm1137 = vcmp.eq.s32.totalorder %v1121, 1
      %vm1138 = vcmp.eq.s32.totalorder %v1122, 1
      %vm1139 = vcmp.eq.s32.totalorder %v1123, 1
      %vm1140 = vcmp.eq.s32.totalorder %v1124, 1
      %vm1141 = vcmp.eq.s32.totalorder %v1125, 1
      %vm1142 = vcmp.eq.s32.totalorder %v1126, 1
      %vm1143 = vcmp.eq.s32.totalorder %v1127, 1
      %vm1144 = vcmp.eq.s32.totalorder %v1128, 1
      %vm1145 = vcmp.eq.s32.totalorder %v1129, 1
      %vm1146 = vcmp.eq.s32.totalorder %v1130, 1
      %vm1147 = vcmp.eq.s32.totalorder %v1131, 1
      %vm1148 = vcmp.eq.s32.totalorder %v1132, 1
      %vm1149 = vcmp.eq.s32.totalorder %v1133, 1
      %v1152 = vrot.slane %v669, 1
      %v1153 = vsel %vm972, %v1004, %v1152
      %v1154 = vrot.slane %v670, 1
      %v1155 = vsel %vm972, %v1152, %v1154
      %v1158 = vsel %vm1134, %v979, 0.0
      %v1159 = vsel %vm1135, %v981, 0.0
      %v1160 = vsel %vm1136, %v983, 0.0
      %v1161 = vsel %vm1137, %v985, 0.0
      %v1162 = vsel %vm1138, %v987, 0.0
      %v1163 = vsel %vm1139, %v989, 0.0
      %v1164 = vsel %vm1140, %v991, 0.0
      %v1165 = vsel %vm1141, %v993, 0.0
      %v1166 = vsel %vm1142, %v995, 0.0
      %v1167 = vsel %vm1143, %v997, 0.0
      %v1168 = vsel %vm1144, %v999, 0.0
      %v1169 = vsel %vm1145, %v1001, 0.0
      %v1170 = vsel %vm1146, %v1003, 0.0
      %v1171 = vsel %vm1147, %v1005, 0.0
      %v1172 = vsel %vm1148, %v1153, 0.0
      %v1173 = vsel %vm1149, %v1155, 0.0
      %v1174 = vpack.c.bf16 %v1159, %v1158
      %v1175 = vpack.c.bf16 %v1161, %v1160
      %v1176 = vpack.c.bf16 %v1163, %v1162
      %v1177 = vpack.c.bf16 %v1165, %v1164
      %v1178 = vpack.c.bf16 %v1167, %v1166
      %v1179 = vpack.c.bf16 %v1169, %v1168
      %v1180 = vpack.c.bf16 %v1171, %v1170
      %v1181 = vpack.c.bf16 %v1173, %v1172
      %v1182 = vld [vmem:[%s4] sm:$0xf]
      %s1183 = scalar_lea.vmem %s4, 4
      %v1184 = vld [vmem:[%s1183] sm:$0xf]
      %vm1185 = vcmask 64512
      %v1187 = vsel %vm1185, %v1038, 0
      %v1190 = vsel %vm1185, %v1039, 0
      %v1193 = vsel %vm1185, %v1040, 0
      %v1196 = vsel %vm1185, %v1041, 0
      %v1199 = vsel %vm1185, %v1042, 0
      %v1202 = vsel %vm1185, %v1043, 0
      %v1205 = vsel %vm1185, %v1044, 0
      %v1208 = vsel %vm1185, %v1045, 0
      %vm1210 = vcmask 1043456
      %v1212 = vsel %vm1210, %v1184, 0
      %1214 = vmatprep.subr.bf16.mxu0 0
      %1215 = vmatpush1.bf16.msra.mxu0 %v1212
      %1216 = vmatprep.subr.bf16.mxu0 0
      %1217 = vmatpush1.bf16.msra.mxu0 0
      %1218 = vmatprep.subr.bf16.mxu0 0
      %1219 = vmatpush1.bf16.msra.mxu0 0
      %1220 = vmatprep.subr.bf16.mxu0 0
      %1221 = vmatpush1.bf16.msra.mxu0 0
      %1222 = vmatprep.subr.bf16.mxu0 0
      %1223 = vmatpush1.bf16.msra.mxu0 0
      %1224 = vmatprep.subr.bf16.mxu0 0
      %1225 = vmatpush1.bf16.msra.mxu0 0
      %1226 = vmatprep.subr.bf16.mxu0 0
      %1227 = vmatpush1.bf16.msra.mxu0 0
      %1228 = vmatprep.subr.bf16.mxu0 0
      %1229 = vmatpush1.bf16.msra.mxu0 0
      %1230 = vmatprep.subr.bf16.mxu0 0
      %1231 = vmatpush1.bf16.msra.mxu0 0
      %1232 = vmatprep.subr.bf16.mxu0 0
      %1233 = vmatpush1.bf16.msra.mxu0 0
      %1234 = vmatprep.subr.bf16.mxu0 0
      %1235 = vmatpush1.bf16.msra.mxu0 0
      %1236 = vmatprep.subr.bf16.mxu0 0
      %1237 = vmatpush1.bf16.msra.mxu0 0
      %1238 = vmatprep.subr.bf16.mxu0 0
      %1239 = vmatpush1.bf16.msra.mxu0 0
      %1240 = vmatprep.subr.bf16.mxu0 0
      %1241 = vmatpush1.bf16.msra.mxu0 0
      %1242 = vmatprep.subr.bf16.mxu0 0
      %1243 = vmatpush1.bf16.msra.mxu0 0
      %1244 = vmatprep.subr.bf16.mxu0 0
      %1245 = vmatpush1.bf16.msra.mxu0 0
      %1246 = vmatprep.mubr.bf16.mxu0 0
      %1247 = vmatmul.mubr.bf16.gmra.mrb[0].mxu0 %v1187
      %v1248 = vpop.f32.mrb[0].mxu0
      %v1249 = vadd.f32 0.0, %v1248
      %v1250 = vpop.f32.mrb[0].mxu0
      %v1251 = vpop.f32.mrb[0].mxu0
      %v1252 = vadd.f32 0.0, %v1251
      %v1253 = vpop.f32.mrb[0].mxu0
      %1254 = vmatprep.mubr.bf16.mxu0 0
      %1255 = vmatmul.mubr.bf16.gmra.mrb[0].mxu0 %v1190
      %v1256 = vpop.f32.mrb[0].mxu0
      %v1257 = vadd.f32 0.0, %v1256
      %v1258 = vpop.f32.mrb[0].mxu0
      %v1259 = vpop.f32.mrb[0].mxu0
      %v1260 = vadd.f32 0.0, %v1259
      %v1261 = vpop.f32.mrb[0].mxu0
      %1262 = vmatprep.mubr.bf16.mxu0 0
      %1263 = vmatmul.mubr.bf16.gmra.mrb[0].mxu0 %v1193
      %v1264 = vpop.f32.mrb[0].mxu0
      %v1265 = vadd.f32 0.0, %v1264
      %v1266 = vpop.f32.mrb[0].mxu0
      %v1267 = vpop.f32.mrb[0].mxu0
      %v1268 = vadd.f32 0.0, %v1267
      %v1269 = vpop.f32.mrb[0].mxu0
      %1270 = vmatprep.mubr.bf16.mxu0 0
      %1271 = vmatmul.mubr.bf16.gmra.mrb[0].mxu0 %v1196
      %v1272 = vpop.f32.mrb[0].mxu0
      %v1273 = vadd.f32 0.0, %v1272
      %v1274 = vpop.f32.mrb[0].mxu0
      %v1275 = vpop.f32.mrb[0].mxu0
      %v1276 = vadd.f32 0.0, %v1275
      %v1277 = vpop.f32.mrb[0].mxu0
      %1278 = vmatprep.mubr.bf16.mxu0 0
      %1279 = vmatmul.mubr.bf16.gmra.mrb[0].mxu0 %v1199
      %v1280 = vpop.f32.mrb[0].mxu0
      %v1281 = vadd.f32 0.0, %v1280
      %v1282 = vpop.f32.mrb[0].mxu0
      %v1283 = vpop.f32.mrb[0].mxu0
      %v1284 = vadd.f32 0.0, %v1283
      %v1285 = vpop.f32.mrb[0].mxu0
      %1286 = vmatprep.mubr.bf16.mxu0 0
      %1287 = vmatmul.mubr.bf16.gmra.mrb[0].mxu0 %v1202
      %v1288 = vpop.f32.mrb[0].mxu0
      %v1289 = vadd.f32 0.0, %v1288
      %v1290 = vpop.f32.mrb[0].mxu0
      %v1291 = vpop.f32.mrb[0].mxu0
      %v1292 = vadd.f32 0.0, %v1291
      %v1293 = vpop.f32.mrb[0].mxu0
      %1294 = vmatprep.mubr.bf16.mxu0 0
      %1295 = vmatmul.mubr.bf16.gmra.mrb[0].mxu0 %v1205
      %v1296 = vpop.f32.mrb[0].mxu0
      %v1297 = vadd.f32 0.0, %v1296
      %v1298 = vpop.f32.mrb[0].mxu0
      %v1299 = vpop.f32.mrb[0].mxu0
      %v1300 = vadd.f32 0.0, %v1299
      %v1301 = vpop.f32.mrb[0].mxu0
      %1302 = vmatprep.mubr.bf16.mxu0 0
      %1303 = vmatmul.mubr.bf16.gmra.mrb[0].mxu0 %v1208
      %v1304 = vpop.f32.mrb[0].mxu0
      %v1305 = vadd.f32 0.0, %v1304
      %v1306 = vpop.f32.mrb[0].mxu0
      %v1307 = vpop.f32.mrb[0].mxu0
      %v1308 = vadd.f32 0.0, %v1307
      %v1309 = vpop.f32.mrb[0].mxu0
      %1310 = vdwg.mxu0
      %v1312 = vsel %vm1185, %v915, 0
      %v1315 = vsel %vm1185, %v916, 0
      %v1318 = vsel %vm1185, %v917, 0
      %v1321 = vsel %vm1185, %v918, 0
      %v1324 = vsel %vm1185, %v919, 0
      %v1327 = vsel %vm1185, %v920, 0
      %v1330 = vsel %vm1185, %v921, 0
      %v1333 = vsel %vm1185, %v922, 0
      %v1336 = vsel %vm1210, %v1182, 0
      %1338 = vmatprep.subr.bf16.mxu0 0
      %1339 = vmatpush1.bf16.msra.mxu0 %v1336
      %1340 = vmatprep.subr.bf16.mxu0 0
      %1341 = vmatpush1.bf16.msra.mxu0 0
      %1342 = vmatprep.subr.bf16.mxu0 0
      %1343 = vmatpush1.bf16.msra.mxu0 0
      %1344 = vmatprep.subr.bf16.mxu0 0
      %1345 = vmatpush1.bf16.msra.mxu0 0
      %1346 = vmatprep.subr.bf16.mxu0 0
      %1347 = vmatpush1.bf16.msra.mxu0 0
      %1348 = vmatprep.subr.bf16.mxu0 0
      %1349 = vmatpush1.bf16.msra.mxu0 0
      %1350 = vmatprep.subr.bf16.mxu0 0
      %1351 = vmatpush1.bf16.msra.mxu0 0
      %1352 = vmatprep.subr.bf16.mxu0 0
      %1353 = vmatpush1.bf16.msra.mxu0 0
      %1354 = vmatprep.subr.bf16.mxu0 0
      %1355 = vmatpush1.bf16.msra.mxu0 0
      %1356 = vmatprep.subr.bf16.mxu0 0
      %1357 = vmatpush1.bf16.msra.mxu0 0
      %1358 = vmatprep.subr.bf16.mxu0 0
      %1359 = vmatpush1.bf16.msra.mxu0 0
      %1360 = vmatprep.subr.bf16.mxu0 0
      %1361 = vmatpush1.bf16.msra.mxu0 0
      %1362 = vmatprep.subr.bf16.mxu0 0
      %1363 = vmatpush1.bf16.msra.mxu0 0
      %1364 = vmatprep.subr.bf16.mxu0 0
      %1365 = vmatpush1.bf16.msra.mxu0 0
      %1366 = vmatprep.subr.bf16.mxu0 0
      %1367 = vmatpush1.bf16.msra.mxu0 0
      %1368 = vmatprep.subr.bf16.mxu0 0
      %1369 = vmatpush1.bf16.msra.mxu0 0
      %1370 = vmatprep.mubr.bf16.mxu0 0
      %1371 = vmatmul.mubr.bf16.gmra.mrb[0].mxu0 %v1312
      %v1372 = vpop.f32.mrb[0].mxu0
      %v1373 = vadd.f32 %v1249, %v1372
      %v1374 = vpop.f32.mrb[0].mxu0
      %v1375 = vpop.f32.mrb[0].mxu0
      %v1376 = vadd.f32 %v1252, %v1375
      %v1377 = vpop.f32.mrb[0].mxu0
      %1378 = vmatprep.mubr.bf16.mxu0 0
      %1379 = vmatmul.mubr.bf16.gmra.mrb[0].mxu0 %v1315
      %v1380 = vpop.f32.mrb[0].mxu0
      %v1381 = vadd.f32 %v1257, %v1380
      %v1382 = vpop.f32.mrb[0].mxu0
      %v1383 = vpop.f32.mrb[0].mxu0
      %v1384 = vadd.f32 %v1260, %v1383
      %v1385 = vpop.f32.mrb[0].mxu0
      %1386 = vmatprep.mubr.bf16.mxu0 0
      %1387 = vmatmul.mubr.bf16.gmra.mrb[0].mxu0 %v1318
      %v1388 = vpop.f32.mrb[0].mxu0
      %v1389 = vadd.f32 %v1265, %v1388
      %v1390 = vpop.f32.mrb[0].mxu0
      %v1391 = vpop.f32.mrb[0].mxu0
      %v1392 = vadd.f32 %v1268, %v1391
      %v1393 = vpop.f32.mrb[0].mxu0
      %1394 = vmatprep.mubr.bf16.mxu0 0
      %1395 = vmatmul.mubr.bf16.gmra.mrb[0].mxu0 %v1321
      %v1396 = vpop.f32.mrb[0].mxu0
      %v1397 = vadd.f32 %v1273, %v1396
      %v1398 = vpop.f32.mrb[0].mxu0
      %v1399 = vpop.f32.mrb[0].mxu0
      %v1400 = vadd.f32 %v1276, %v1399
      %v1401 = vpop.f32.mrb[0].mxu0
      %1402 = vmatprep.mubr.bf16.mxu0 0
      %1403 = vmatmul.mubr.bf16.gmra.mrb[0].mxu0 %v1324
      %v1404 = vpop.f32.mrb[0].mxu0
      %v1405 = vadd.f32 %v1281, %v1404
      %v1406 = vpop.f32.mrb[0].mxu0
      %v1407 = vpop.f32.mrb[0].mxu0
      %v1408 = vadd.f32 %v1284, %v1407
      %v1409 = vpop.f32.mrb[0].mxu0
      %1410 = vmatprep.mubr.bf16.mxu0 0
      %1411 = vmatmul.mubr.bf16.gmra.mrb[0].mxu0 %v1327
      %v1412 = vpop.f32.mrb[0].mxu0
      %v1413 = vadd.f32 %v1289, %v1412
      %v1414 = vpop.f32.mrb[0].mxu0
      %v1415 = vpop.f32.mrb[0].mxu0
      %v1416 = vadd.f32 %v1292, %v1415
      %v1417 = vpop.f32.mrb[0].mxu0
      %1418 = vmatprep.mubr.bf16.mxu0 0
      %1419 = vmatmul.mubr.bf16.gmra.mrb[0].mxu0 %v1330
      %v1420 = vpop.f32.mrb[0].mxu0
      %v1421 = vadd.f32 %v1297, %v1420
      %v1422 = vpop.f32.mrb[0].mxu0
      %v1423 = vpop.f32.mrb[0].mxu0
      %v1424 = vadd.f32 %v1300, %v1423
      %v1425 = vpop.f32.mrb[0].mxu0
      %1426 = vmatprep.mubr.bf16.mxu0 0
      %1427 = vmatmul.mubr.bf16.gmra.mrb[0].mxu0 %v1333
      %v1428 = vpop.f32.mrb[0].mxu0
      %v1429 = vadd.f32 %v1305, %v1428
      %v1430 = vpop.f32.mrb[0].mxu0
      %v1431 = vpop.f32.mrb[0].mxu0
      %v1432 = vadd.f32 %v1308, %v1431
      %v1433 = vpop.f32.mrb[0].mxu0
      %1434 = vdwg.mxu0
      %s1435 = scalar_lea.vmem %s4, 8
      %v1436 = vld [vmem:[%s1435] sm:$0xf]
      %v1438 = vsel %vm1185, %v1094, 0
      %v1441 = vsel %vm1185, %v1095, 0
      %v1444 = vsel %vm1185, %v1096, 0
      %v1447 = vsel %vm1185, %v1097, 0
      %v1450 = vsel %vm1185, %v1098, 0
      %v1453 = vsel %vm1185, %v1099, 0
      %v1456 = vsel %vm1185, %v1100, 0
      %v1459 = vsel %vm1185, %v1101, 0
      %v1462 = vsel %vm1210, %v1436, 0
      %1464 = vmatprep.subr.bf16.mxu0 0
      %1465 = vmatpush1.bf16.msra.mxu0 %v1462
      %1466 = vmatprep.subr.bf16.mxu0 0
      %1467 = vmatpush1.bf16.msra.mxu0 0
      %1468 = vmatprep.subr.bf16.mxu0 0
      %1469 = vmatpush1.bf16.msra.mxu0 0
      %1470 = vmatprep.subr.bf16.mxu0 0
      %1471 = vmatpush1.bf16.msra.mxu0 0
      %1472 = vmatprep.subr.bf16.mxu0 0
      %1473 = vmatpush1.bf16.msra.mxu0 0
      %1474 = vmatprep.subr.bf16.mxu0 0
      %1475 = vmatpush1.bf16.msra.mxu0 0
      %1476 = vmatprep.subr.bf16.mxu0 0
      %1477 = vmatpush1.bf16.msra.mxu0 0
      %1478 = vmatprep.subr.bf16.mxu0 0
      %1479 = vmatpush1.bf16.msra.mxu0 0
      %1480 = vmatprep.subr.bf16.mxu0 0
      %1481 = vmatpush1.bf16.msra.mxu0 0
      %1482 = vmatprep.subr.bf16.mxu0 0
      %1483 = vmatpush1.bf16.msra.mxu0 0
      %1484 = vmatprep.subr.bf16.mxu0 0
      %1485 = vmatpush1.bf16.msra.mxu0 0
      %1486 = vmatprep.subr.bf16.mxu0 0
      %1487 = vmatpush1.bf16.msra.mxu0 0
      %1488 = vmatprep.subr.bf16.mxu0 0
      %1489 = vmatpush1.bf16.msra.mxu0 0
      %1490 = vmatprep.subr.bf16.mxu0 0
      %1491 = vmatpush1.bf16.msra.mxu0 0
      %1492 = vmatprep.subr.bf16.mxu0 0
      %1493 = vmatpush1.bf16.msra.mxu0 0
      %1494 = vmatprep.subr.bf16.mxu0 0
      %1495 = vmatpush1.bf16.msra.mxu0 0
      %1496 = vmatprep.mubr.bf16.mxu0 0
      %1497 = vmatmul.mubr.bf16.gmra.mrb[0].mxu0 %v1438
      %v1498 = vpop.f32.mrb[0].mxu0
      %v1499 = vadd.f32 0.0, %v1498
      %v1500 = vpop.f32.mrb[0].mxu0
      %v1501 = vpop.f32.mrb[0].mxu0
      %v1502 = vadd.f32 0.0, %v1501
      %v1503 = vpop.f32.mrb[0].mxu0
      %1504 = vmatprep.mubr.bf16.mxu0 0
      %1505 = vmatmul.mubr.bf16.gmra.mrb[0].mxu0 %v1441
      %v1506 = vpop.f32.mrb[0].mxu0
      %v1507 = vadd.f32 0.0, %v1506
      %v1508 = vpop.f32.mrb[0].mxu0
      %v1509 = vpop.f32.mrb[0].mxu0
      %v1510 = vadd.f32 0.0, %v1509
      %v1511 = vpop.f32.mrb[0].mxu0
      %1512 = vmatprep.mubr.bf16.mxu0 0
      %1513 = vmatmul.mubr.bf16.gmra.mrb[0].mxu0 %v1444
      %v1514 = vpop.f32.mrb[0].mxu0
      %v1515 = vadd.f32 0.0, %v1514
      %v1516 = vpop.f32.mrb[0].mxu0
      %v1517 = vpop.f32.mrb[0].mxu0
      %v1518 = vadd.f32 0.0, %v1517
      %v1519 = vpop.f32.mrb[0].mxu0
      %1520 = vmatprep.mubr.bf16.mxu0 0
      %1521 = vmatmul.mubr.bf16.gmra.mrb[0].mxu0 %v1447
      %v1522 = vpop.f32.mrb[0].mxu0
      %v1523 = vadd.f32 0.0, %v1522
      %v1524 = vpop.f32.mrb[0].mxu0
      %v1525 = vpop.f32.mrb[0].mxu0
      %v1526 = vadd.f32 0.0, %v1525
      %v1527 = vpop.f32.mrb[0].mxu0
      %1528 = vmatprep.mubr.bf16.mxu0 0
      %1529 = vmatmul.mubr.bf16.gmra.mrb[0].mxu0 %v1450
      %v1530 = vpop.f32.mrb[0].mxu0
      %v1531 = vadd.f32 0.0, %v1530
      %v1532 = vpop.f32.mrb[0].mxu0
      %v1533 = vpop.f32.mrb[0].mxu0
      %v1534 = vadd.f32 0.0, %v1533
      %v1535 = vpop.f32.mrb[0].mxu0
      %1536 = vmatprep.mubr.bf16.mxu0 0
      %1537 = vmatmul.mubr.bf16.gmra.mrb[0].mxu0 %v1453
      %v1538 = vpop.f32.mrb[0].mxu0
      %v1539 = vadd.f32 0.0, %v1538
      %v1540 = vpop.f32.mrb[0].mxu0
      %v1541 = vpop.f32.mrb[0].mxu0
      %v1542 = vadd.f32 0.0, %v1541
      %v1543 = vpop.f32.mrb[0].mxu0
      %1544 = vmatprep.mubr.bf16.mxu0 0
      %1545 = vmatmul.mubr.bf16.gmra.mrb[0].mxu0 %v1456
      %v1546 = vpop.f32.mrb[0].mxu0
      %v1547 = vadd.f32 0.0, %v1546
      %v1548 = vpop.f32.mrb[0].mxu0
      %v1549 = vpop.f32.mrb[0].mxu0
      %v1550 = vadd.f32 0.0, %v1549
      %v1551 = vpop.f32.mrb[0].mxu0
      %1552 = vmatprep.mubr.bf16.mxu0 0
      %1553 = vmatmul.mubr.bf16.gmra.mrb[0].mxu0 %v1459
      %v1554 = vpop.f32.mrb[0].mxu0
      %v1555 = vadd.f32 0.0, %v1554
      %v1556 = vpop.f32.mrb[0].mxu0
      %v1557 = vpop.f32.mrb[0].mxu0
      %v1558 = vadd.f32 0.0, %v1557
      %v1559 = vpop.f32.mrb[0].mxu0
      %1560 = vdwg.mxu0
      %v1561 = vadd.f32 %v1373, %v1499
      %v1562 = vadd.f32 %v1376, %v1502
      %v1563 = vadd.f32 %v1381, %v1507
      %v1564 = vadd.f32 %v1384, %v1510
      %v1565 = vadd.f32 %v1389, %v1515
      %v1566 = vadd.f32 %v1392, %v1518
      %v1567 = vadd.f32 %v1397, %v1523
      %v1568 = vadd.f32 %v1400, %v1526
      %v1569 = vadd.f32 %v1405, %v1531
      %v1570 = vadd.f32 %v1408, %v1534
      %v1571 = vadd.f32 %v1413, %v1539
      %v1572 = vadd.f32 %v1416, %v1542
      %v1573 = vadd.f32 %v1421, %v1547
      %v1574 = vadd.f32 %v1424, %v1550
      %v1575 = vadd.f32 %v1429, %v1555
      %v1576 = vadd.f32 %v1432, %v1558
      %s1577 = scalar_lea.vmem %s4, 12
      %v1578 = vld [vmem:[%s1577] sm:$0xf]
      %v1580 = vsel %vm1185, %v1174, 0
      %v1583 = vsel %vm1185, %v1175, 0
      %v1586 = vsel %vm1185, %v1176, 0
      %v1589 = vsel %vm1185, %v1177, 0
      %v1592 = vsel %vm1185, %v1178, 0
      %v1595 = vsel %vm1185, %v1179, 0
      %v1598 = vsel %vm1185, %v1180, 0
      %v1601 = vsel %vm1185, %v1181, 0
      %v1604 = vsel %vm1210, %v1578, 0
      %1606 = vmatprep.subr.bf16.mxu0 0
      %1607 = vmatpush1.bf16.msra.mxu0 %v1604
      %1608 = vmatprep.subr.bf16.mxu0 0
      %1609 = vmatpush1.bf16.msra.mxu0 0
      %1610 = vmatprep.subr.bf16.mxu0 0
      %1611 = vmatpush1.bf16.msra.mxu0 0
      %1612 = vmatprep.subr.bf16.mxu0 0
      %1613 = vmatpush1.bf16.msra.mxu0 0
      %1614 = vmatprep.subr.bf16.mxu0 0
      %1615 = vmatpush1.bf16.msra.mxu0 0
      %1616 = vmatprep.subr.bf16.mxu0 0
      %1617 = vmatpush1.bf16.msra.mxu0 0
      %1618 = vmatprep.subr.bf16.mxu0 0
      %1619 = vmatpush1.bf16.msra.mxu0 0
      %1620 = vmatprep.subr.bf16.mxu0 0
      %1621 = vmatpush1.bf16.msra.mxu0 0
      %1622 = vmatprep.subr.bf16.mxu0 0
      %1623 = vmatpush1.bf16.msra.mxu0 0
      %1624 = vmatprep.subr.bf16.mxu0 0
      %1625 = vmatpush1.bf16.msra.mxu0 0
      %1626 = vmatprep.subr.bf16.mxu0 0
      %1627 = vmatpush1.bf16.msra.mxu0 0
      %1628 = vmatprep.subr.bf16.mxu0 0
      %1629 = vmatpush1.bf16.msra.mxu0 0
      %1630 = vmatprep.subr.bf16.mxu0 0
      %1631 = vmatpush1.bf16.msra.mxu0 0
      %1632 = vmatprep.subr.bf16.mxu0 0
      %1633 = vmatpush1.bf16.msra.mxu0 0
      %1634 = vmatprep.subr.bf16.mxu0 0
      %1635 = vmatpush1.bf16.msra.mxu0 0
      %1636 = vmatprep.subr.bf16.mxu0 0
      %1637 = vmatpush1.bf16.msra.mxu0 0
      %1638 = vmatprep.mubr.bf16.mxu0 0
      %1639 = vmatmul.mubr.bf16.gmra.mrb[0].mxu0 %v1580
      %v1640 = vpop.f32.mrb[0].mxu0
      %v1641 = vadd.f32 0.0, %v1640
      %v1642 = vpop.f32.mrb[0].mxu0
      %v1643 = vpop.f32.mrb[0].mxu0
      %v1644 = vadd.f32 0.0, %v1643
      %v1645 = vpop.f32.mrb[0].mxu0
      %1646 = vmatprep.mubr.bf16.mxu0 0
      %1647 = vmatmul.mubr.bf16.gmra.mrb[0].mxu0 %v1583
      %v1648 = vpop.f32.mrb[0].mxu0
      %v1649 = vadd.f32 0.0, %v1648
      %v1650 = vpop.f32.mrb[0].mxu0
      %v1651 = vpop.f32.mrb[0].mxu0
      %v1652 = vadd.f32 0.0, %v1651
      %v1653 = vpop.f32.mrb[0].mxu0
      %1654 = vmatprep.mubr.bf16.mxu0 0
      %1655 = vmatmul.mubr.bf16.gmra.mrb[0].mxu0 %v1586
      %v1656 = vpop.f32.mrb[0].mxu0
      %v1657 = vadd.f32 0.0, %v1656
      %v1658 = vpop.f32.mrb[0].mxu0
      %v1659 = vpop.f32.mrb[0].mxu0
      %v1660 = vadd.f32 0.0, %v1659
      %v1661 = vpop.f32.mrb[0].mxu0
      %1662 = vmatprep.mubr.bf16.mxu0 0
      %1663 = vmatmul.mubr.bf16.gmra.mrb[0].mxu0 %v1589
      %v1664 = vpop.f32.mrb[0].mxu0
      %v1665 = vadd.f32 0.0, %v1664
      %v1666 = vpop.f32.mrb[0].mxu0
      %v1667 = vpop.f32.mrb[0].mxu0
      %v1668 = vadd.f32 0.0, %v1667
      %v1669 = vpop.f32.mrb[0].mxu0
      %1670 = vmatprep.mubr.bf16.mxu0 0
      %1671 = vmatmul.mubr.bf16.gmra.mrb[0].mxu0 %v1592
      %v1672 = vpop.f32.mrb[0].mxu0
      %v1673 = vadd.f32 0.0, %v1672
      %v1674 = vpop.f32.mrb[0].mxu0
      %v1675 = vpop.f32.mrb[0].mxu0
      %v1676 = vadd.f32 0.0, %v1675
      %v1677 = vpop.f32.mrb[0].mxu0
      %1678 = vmatprep.mubr.bf16.mxu0 0
      %1679 = vmatmul.mubr.bf16.gmra.mrb[0].mxu0 %v1595
      %v1680 = vpop.f32.mrb[0].mxu0
      %v1681 = vadd.f32 0.0, %v1680
      %v1682 = vpop.f32.mrb[0].mxu0
      %v1683 = vpop.f32.mrb[0].mxu0
      %v1684 = vadd.f32 0.0, %v1683
      %v1685 = vpop.f32.mrb[0].mxu0
      %1686 = vmatprep.mubr.bf16.mxu0 0
      %1687 = vmatmul.mubr.bf16.gmra.mrb[0].mxu0 %v1598
      %v1688 = vpop.f32.mrb[0].mxu0
      %v1689 = vadd.f32 0.0, %v1688
      %v1690 = vpop.f32.mrb[0].mxu0
      %v1691 = vpop.f32.mrb[0].mxu0
      %v1692 = vadd.f32 0.0, %v1691
      %v1693 = vpop.f32.mrb[0].mxu0
      %1694 = vmatprep.mubr.bf16.mxu0 0
      %1695 = vmatmul.mubr.bf16.gmra.mrb[0].mxu0 %v1601
      %v1696 = vpop.f32.mrb[0].mxu0
      %v1697 = vadd.f32 0.0, %v1696
      %v1698 = vpop.f32.mrb[0].mxu0
      %v1699 = vpop.f32.mrb[0].mxu0
      %v1700 = vadd.f32 0.0, %v1699
      %v1701 = vpop.f32.mrb[0].mxu0
      %1702 = vdwg.mxu0
      %v1703 = vadd.f32 %v1561, %v1641
      %v1704 = vadd.f32 %v1562, %v1644
      %v1705 = vadd.f32 %v1563, %v1649
      %v1706 = vadd.f32 %v1564, %v1652
      %v1707 = vadd.f32 %v1565, %v1657
      %v1708 = vadd.f32 %v1566, %v1660
      %v1709 = vadd.f32 %v1567, %v1665
      %v1710 = vadd.f32 %v1568, %v1668
      %v1711 = vadd.f32 %v1569, %v1673
      %v1712 = vadd.f32 %v1570, %v1676
      %v1713 = vadd.f32 %v1571, %v1681
      %v1714 = vadd.f32 %v1572, %v1684
      %v1715 = vadd.f32 %v1573, %v1689
      %v1716 = vadd.f32 %v1574, %v1692
      %v1717 = vadd.f32 %v1575, %v1697
      %v1718 = vadd.f32 %v1576, %v1700
      %v1719 = vld [vmem:[%s5] sm:$0x1]
      %v1721 = vlaneseq
      %v1722 = vshrl.u32 %v1721, 7
      %v1723 = vsub.s32 0, %v1722
      %v1724 = vrot.slane %v1719, %v1723
      %v1726 = vadd.f32 %v1703, %v1724
      %v1727 = vadd.f32 %v1704, %v1724
      %v1728 = vadd.f32 %v1705, %v1724
      %v1729 = vadd.f32 %v1706, %v1724
      %v1730 = vadd.f32 %v1707, %v1724
      %v1731 = vadd.f32 %v1708, %v1724
      %v1732 = vadd.f32 %v1709, %v1724
      %v1733 = vadd.f32 %v1710, %v1724
      %v1734 = vadd.f32 %v1711, %v1724
      %v1735 = vadd.f32 %v1712, %v1724
      %v1736 = vadd.f32 %v1713, %v1724
      %v1737 = vadd.f32 %v1714, %v1724
      %v1738 = vadd.f32 %v1715, %v1724
      %v1739 = vadd.f32 %v1716, %v1724
      %v1740 = vadd.f32 %v1717, %v1724
      %v1741 = vadd.f32 %v1718, %v1724
      %vm1742 = vcmp.ge.f32.partialorder %v1726, 0.0
      %vm1743 = vcmp.ge.f32.partialorder %v1727, 0.0
      %vm1744 = vcmp.ge.f32.partialorder %v1728, 0.0
      %vm1745 = vcmp.ge.f32.partialorder %v1729, 0.0
      %vm1746 = vcmp.ge.f32.partialorder %v1730, 0.0
      %vm1747 = vcmp.ge.f32.partialorder %v1731, 0.0
      %vm1748 = vcmp.ge.f32.partialorder %v1732, 0.0
      %vm1749 = vcmp.ge.f32.partialorder %v1733, 0.0
      %vm1750 = vcmp.ge.f32.partialorder %v1734, 0.0
      %vm1751 = vcmp.ge.f32.partialorder %v1735, 0.0
      %vm1752 = vcmp.ge.f32.partialorder %v1736, 0.0
      %vm1753 = vcmp.ge.f32.partialorder %v1737, 0.0
      %vm1754 = vcmp.ge.f32.partialorder %v1738, 0.0
      %vm1755 = vcmp.ge.f32.partialorder %v1739, 0.0
      %vm1756 = vcmp.ge.f32.partialorder %v1740, 0.0
      %vm1757 = vcmp.ge.f32.partialorder %v1741, 0.0
      %v1758 = vmul.f32 %v1726, 0.01
      %v1759 = vmul.f32 %v1727, 0.01
      %v1760 = vmul.f32 %v1728, 0.01
      %v1761 = vmul.f32 %v1729, 0.01
      %v1762 = vmul.f32 %v1730, 0.01
      %v1763 = vmul.f32 %v1731, 0.01
      %v1764 = vmul.f32 %v1732, 0.01
      %v1765 = vmul.f32 %v1733, 0.01
      %v1766 = vmul.f32 %v1734, 0.01
      %v1767 = vmul.f32 %v1735, 0.01
      %v1768 = vmul.f32 %v1736, 0.01
      %v1769 = vmul.f32 %v1737, 0.01
      %v1770 = vmul.f32 %v1738, 0.01
      %v1771 = vmul.f32 %v1739, 0.01
      %v1772 = vmul.f32 %v1740, 0.01
      %v1773 = vmul.f32 %v1741, 0.01
      %v1774 = vsel %vm1742, %v1726, %v1758
      %v1775 = vsel %vm1743, %v1727, %v1759
      %v1776 = vsel %vm1744, %v1728, %v1760
      %v1777 = vsel %vm1745, %v1729, %v1761
      %v1778 = vsel %vm1746, %v1730, %v1762
      %v1779 = vsel %vm1747, %v1731, %v1763
      %v1780 = vsel %vm1748, %v1732, %v1764
      %v1781 = vsel %vm1749, %v1733, %v1765
      %v1782 = vsel %vm1750, %v1734, %v1766
      %v1783 = vsel %vm1751, %v1735, %v1767
      %v1784 = vsel %vm1752, %v1736, %v1768
      %v1785 = vsel %vm1753, %v1737, %v1769
      %v1786 = vsel %vm1754, %v1738, %v1770
      %v1787 = vsel %vm1755, %v1739, %v1771
      %v1788 = vsel %vm1756, %v1740, %v1772
      %v1789 = vsel %vm1757, %v1741, %v1773
      %v1790 = vpack.c.bf16 %v1775, %v1774
      %v1791 = vpack.c.bf16 %v1777, %v1776
      %v1792 = vpack.c.bf16 %v1779, %v1778
      %v1793 = vpack.c.bf16 %v1781, %v1780
      %v1794 = vpack.c.bf16 %v1783, %v1782
      %v1795 = vpack.c.bf16 %v1785, %v1784
      %v1796 = vpack.c.bf16 %v1787, %v1786
      %v1797 = vpack.c.bf16 %v1789, %v1788
      %v1798 = vld [vmem:[%s6] sm:$0xf]
      %v1799 = vld [vmem:[%s6 + $0x4] sm:$0xf]
      %v1800 = vld [vmem:[%s6 + $0x8] sm:$0xf]
      %v1801 = vld [vmem:[%s6 + $0xc] sm:$0xf]
      %v1802 = vld [vmem:[%s7] sm:$0x1]
      %v1804 = vlaneseq
      %v1805 = vshrl.u32 %v1804, 7
      %v1806 = vsub.s32 0, %v1805
      %v1807 = vrot.slane %v1802, %v1806
      %v1813 = vunpack.c.l.b16 %v1798
      %v1814 = vunpack.c.l.b16 %v1799
      %v1815 = vunpack.c.l.b16 %v1800
      %v1816 = vunpack.c.l.b16 %v1801
      %v1817 = vpack.c.b16 %v1814, %v1813
      %v1818 = vpack.c.b16 %v1816, %v1815
      %vm1821 = vcmask 261120
      %v1823 = vsel %vm1821, %v1790, 0
      %v1826 = vsel %vm1821, %v1791, 0
      %v1829 = vsel %vm1821, %v1792, 0
      %v1832 = vsel %vm1821, %v1793, 0
      %v1835 = vsel %vm1821, %v1794, 0
      %v1838 = vsel %vm1821, %v1795, 0
      %v1841 = vsel %vm1821, %v1796, 0
      %v1844 = vsel %vm1821, %v1797, 0
      %1846 = vmatprep.subr.bf16.mxu0 0
      %1847 = vmatpush1.bf16.msra.mxu0 %v1817
      %1848 = vmatprep.subr.bf16.mxu0 0
      %1849 = vmatpush1.bf16.msra.mxu0 %v1818
      %1850 = vmatprep.subr.bf16.mxu0 0
      %1851 = vmatpush1.bf16.msra.mxu0 0
      %1852 = vmatprep.subr.bf16.mxu0 0
      %1853 = vmatpush1.bf16.msra.mxu0 0
      %1854 = vmatprep.subr.bf16.mxu0 0
      %1855 = vmatpush1.bf16.msra.mxu0 0
      %1856 = vmatprep.subr.bf16.mxu0 0
      %1857 = vmatpush1.bf16.msra.mxu0 0
      %1858 = vmatprep.subr.bf16.mxu0 0
      %1859 = vmatpush1.bf16.msra.mxu0 0
      %1860 = vmatprep.subr.bf16.mxu0 0
      %1861 = vmatpush1.bf16.msra.mxu0 0
      %1862 = vmatprep.subr.bf16.mxu0 0
      %1863 = vmatpush1.bf16.msra.mxu0 0
      %1864 = vmatprep.subr.bf16.mxu0 0
      %1865 = vmatpush1.bf16.msra.mxu0 0
      %1866 = vmatprep.subr.bf16.mxu0 0
      %1867 = vmatpush1.bf16.msra.mxu0 0
      %1868 = vmatprep.subr.bf16.mxu0 0
      %1869 = vmatpush1.bf16.msra.mxu0 0
      %1870 = vmatprep.subr.bf16.mxu0 0
      %1871 = vmatpush1.bf16.msra.mxu0 0
      %1872 = vmatprep.subr.bf16.mxu0 0
      %1873 = vmatpush1.bf16.msra.mxu0 0
      %1874 = vmatprep.subr.bf16.mxu0 0
      %1875 = vmatpush1.bf16.msra.mxu0 0
      %1876 = vmatprep.subr.bf16.mxu0 0
      %1877 = vmatpush1.bf16.msra.mxu0 0
      %1878 = vmatprep.mubr.bf16.mxu0 0
      %1879 = vmatmul.mubr.bf16.gmra.mrb[0].mxu0 %v1823
      %v1880 = vpop.f32.mrb[0].mxu0
      %v1881 = vadd.f32 %v1807, %v1880
      %v1882 = vpop.f32.mrb[0].mxu0
      %v1883 = vpop.f32.mrb[0].mxu0
      %v1884 = vadd.f32 %v1807, %v1883
      %v1885 = vpop.f32.mrb[0].mxu0
      %1886 = vmatprep.mubr.bf16.mxu0 0
      %1887 = vmatmul.mubr.bf16.gmra.mrb[0].mxu0 %v1826
      %v1888 = vpop.f32.mrb[0].mxu0
      %v1889 = vadd.f32 %v1807, %v1888
      %v1890 = vpop.f32.mrb[0].mxu0
      %v1891 = vpop.f32.mrb[0].mxu0
      %v1892 = vadd.f32 %v1807, %v1891
      %v1893 = vpop.f32.mrb[0].mxu0
      %1894 = vmatprep.mubr.bf16.mxu0 0
      %1895 = vmatmul.mubr.bf16.gmra.mrb[0].mxu0 %v1829
      %v1896 = vpop.f32.mrb[0].mxu0
      %v1897 = vadd.f32 %v1807, %v1896
      %v1898 = vpop.f32.mrb[0].mxu0
      %v1899 = vpop.f32.mrb[0].mxu0
      %v1900 = vadd.f32 %v1807, %v1899
      %v1901 = vpop.f32.mrb[0].mxu0
      %1902 = vmatprep.mubr.bf16.mxu0 0
      %1903 = vmatmul.mubr.bf16.gmra.mrb[0].mxu0 %v1832
      %v1904 = vpop.f32.mrb[0].mxu0
      %v1905 = vadd.f32 %v1807, %v1904
      %v1906 = vpop.f32.mrb[0].mxu0
      %v1907 = vpop.f32.mrb[0].mxu0
      %v1908 = vadd.f32 %v1807, %v1907
      %v1909 = vpop.f32.mrb[0].mxu0
      %1910 = vmatprep.mubr.bf16.mxu0 0
      %1911 = vmatmul.mubr.bf16.gmra.mrb[0].mxu0 %v1835
      %v1912 = vpop.f32.mrb[0].mxu0
      %v1913 = vadd.f32 %v1807, %v1912
      %v1914 = vpop.f32.mrb[0].mxu0
      %v1915 = vpop.f32.mrb[0].mxu0
      %v1916 = vadd.f32 %v1807, %v1915
      %v1917 = vpop.f32.mrb[0].mxu0
      %1918 = vmatprep.mubr.bf16.mxu0 0
      %1919 = vmatmul.mubr.bf16.gmra.mrb[0].mxu0 %v1838
      %v1920 = vpop.f32.mrb[0].mxu0
      %v1921 = vadd.f32 %v1807, %v1920
      %v1922 = vpop.f32.mrb[0].mxu0
      %v1923 = vpop.f32.mrb[0].mxu0
      %v1924 = vadd.f32 %v1807, %v1923
      %v1925 = vpop.f32.mrb[0].mxu0
      %1926 = vmatprep.mubr.bf16.mxu0 0
      %1927 = vmatmul.mubr.bf16.gmra.mrb[0].mxu0 %v1841
      %v1928 = vpop.f32.mrb[0].mxu0
      %v1929 = vadd.f32 %v1807, %v1928
      %v1930 = vpop.f32.mrb[0].mxu0
      %v1931 = vpop.f32.mrb[0].mxu0
      %v1932 = vadd.f32 %v1807, %v1931
      %v1933 = vpop.f32.mrb[0].mxu0
      %1934 = vmatprep.mubr.bf16.mxu0 0
      %1935 = vmatmul.mubr.bf16.gmra.mrb[0].mxu0 %v1844
      %v1936 = vpop.f32.mrb[0].mxu0
      %v1937 = vadd.f32 %v1807, %v1936
      %v1938 = vpop.f32.mrb[0].mxu0
      %v1939 = vpop.f32.mrb[0].mxu0
      %v1940 = vadd.f32 %v1807, %v1939
      %v1941 = vpop.f32.mrb[0].mxu0
      %1942 = vdwg.mxu0
      %v1943 = vld [vmem:[%s8] sm:$0x3]
      %v1944 = vld [vmem:[%s9] sm:$0x1]
      %v1946 = vlaneseq
      %v1947 = vshrl.u32 %v1946, 7
      %v1948 = vsub.s32 0, %v1947
      %v1949 = vrot.slane %v1944, %v1948
      %v1952 = vsel %vm498, %v1943, 0
      %1954 = vmatprep.subr.bf16.mxu0 0
      %1955 = vmatpush1.bf16.msra.mxu0 %v1952
      %1956 = vmatprep.subr.bf16.mxu0 0
      %1957 = vmatpush1.bf16.msra.mxu0 0
      %1958 = vmatprep.subr.bf16.mxu0 0
      %1959 = vmatpush1.bf16.msra.mxu0 0
      %1960 = vmatprep.subr.bf16.mxu0 0
      %1961 = vmatpush1.bf16.msra.mxu0 0
      %1962 = vmatprep.subr.bf16.mxu0 0
      %1963 = vmatpush1.bf16.msra.mxu0 0
      %1964 = vmatprep.subr.bf16.mxu0 0
      %1965 = vmatpush1.bf16.msra.mxu0 0
      %1966 = vmatprep.subr.bf16.mxu0 0
      %1967 = vmatpush1.bf16.msra.mxu0 0
      %1968 = vmatprep.subr.bf16.mxu0 0
      %1969 = vmatpush1.bf16.msra.mxu0 0
      %1970 = vmatprep.subr.bf16.mxu0 0
      %1971 = vmatpush1.bf16.msra.mxu0 0
      %1972 = vmatprep.subr.bf16.mxu0 0
      %1973 = vmatpush1.bf16.msra.mxu0 0
      %1974 = vmatprep.subr.bf16.mxu0 0
      %1975 = vmatpush1.bf16.msra.mxu0 0
      %1976 = vmatprep.subr.bf16.mxu0 0
      %1977 = vmatpush1.bf16.msra.mxu0 0
      %1978 = vmatprep.subr.bf16.mxu0 0
      %1979 = vmatpush1.bf16.msra.mxu0 0
      %1980 = vmatprep.subr.bf16.mxu0 0
      %1981 = vmatpush1.bf16.msra.mxu0 0
      %1982 = vmatprep.subr.bf16.mxu0 0
      %1983 = vmatpush1.bf16.msra.mxu0 0
      %1984 = vmatprep.subr.bf16.mxu0 0
      %1985 = vmatpush1.bf16.msra.mxu0 0
      %1986 = vmatprep.mubr.bf16.mxu0 0
      %1987 = vmatmul.mubr.bf16.gmra.mrb[0].mxu0 %v469
      %v1988 = vpop.f32.mrb[0].mxu0
      %v1989 = vadd.f32 %v1949, %v1988
      %v1990 = vpop.f32.mrb[0].mxu0
      %v1991 = vpop.f32.mrb[0].mxu0
      %v1992 = vadd.f32 %v1949, %v1991
      %v1993 = vpop.f32.mrb[0].mxu0
      %1994 = vmatprep.mubr.bf16.mxu0 0
      %1995 = vmatmul.mubr.bf16.gmra.mrb[0].mxu0 %v472
      %v1996 = vpop.f32.mrb[0].mxu0
      %v1997 = vadd.f32 %v1949, %v1996
      %v1998 = vpop.f32.mrb[0].mxu0
      %v1999 = vpop.f32.mrb[0].mxu0
      %v2000 = vadd.f32 %v1949, %v1999
      %v2001 = vpop.f32.mrb[0].mxu0
      %2002 = vmatprep.mubr.bf16.mxu0 0
      %2003 = vmatmul.mubr.bf16.gmra.mrb[0].mxu0 %v475
      %v2004 = vpop.f32.mrb[0].mxu0
      %v2005 = vadd.f32 %v1949, %v2004
      %v2006 = vpop.f32.mrb[0].mxu0
      %v2007 = vpop.f32.mrb[0].mxu0
      %v2008 = vadd.f32 %v1949, %v2007
      %v2009 = vpop.f32.mrb[0].mxu0
      %2010 = vmatprep.mubr.bf16.mxu0 0
      %2011 = vmatmul.mubr.bf16.gmra.mrb[0].mxu0 %v478
      %v2012 = vpop.f32.mrb[0].mxu0
      %v2013 = vadd.f32 %v1949, %v2012
      %v2014 = vpop.f32.mrb[0].mxu0
      %v2015 = vpop.f32.mrb[0].mxu0
      %v2016 = vadd.f32 %v1949, %v2015
      %v2017 = vpop.f32.mrb[0].mxu0
      %2018 = vmatprep.mubr.bf16.mxu0 0
      %2019 = vmatmul.mubr.bf16.gmra.mrb[0].mxu0 %v481
      %v2020 = vpop.f32.mrb[0].mxu0
      %v2021 = vadd.f32 %v1949, %v2020
      %v2022 = vpop.f32.mrb[0].mxu0
      %v2023 = vpop.f32.mrb[0].mxu0
      %v2024 = vadd.f32 %v1949, %v2023
      %v2025 = vpop.f32.mrb[0].mxu0
      %2026 = vmatprep.mubr.bf16.mxu0 0
      %2027 = vmatmul.mubr.bf16.gmra.mrb[0].mxu0 %v484
      %v2028 = vpop.f32.mrb[0].mxu0
      %v2029 = vadd.f32 %v1949, %v2028
      %v2030 = vpop.f32.mrb[0].mxu0
      %v2031 = vpop.f32.mrb[0].mxu0
      %v2032 = vadd.f32 %v1949, %v2031
      %v2033 = vpop.f32.mrb[0].mxu0
      %2034 = vmatprep.mubr.bf16.mxu0 0
      %2035 = vmatmul.mubr.bf16.gmra.mrb[0].mxu0 %v487
      %v2036 = vpop.f32.mrb[0].mxu0
      %v2037 = vadd.f32 %v1949, %v2036
      %v2038 = vpop.f32.mrb[0].mxu0
      %v2039 = vpop.f32.mrb[0].mxu0
      %v2040 = vadd.f32 %v1949, %v2039
      %v2041 = vpop.f32.mrb[0].mxu0
      %2042 = vmatprep.mubr.bf16.mxu0 0
      %2043 = vmatmul.mubr.bf16.gmra.mrb[0].mxu0 %v490
      %v2044 = vpop.f32.mrb[0].mxu0
      %v2045 = vadd.f32 %v1949, %v2044
      %v2046 = vpop.f32.mrb[0].mxu0
      %v2047 = vpop.f32.mrb[0].mxu0
      %v2048 = vadd.f32 %v1949, %v2047
      %v2049 = vpop.f32.mrb[0].mxu0
      %2050 = vdwg.mxu0
      %v2051 = vadd.f32 %v1881, %v1989
      %v2052 = vadd.f32 %v1884, %v1992
      %v2053 = vadd.f32 %v1889, %v1997
      %v2054 = vadd.f32 %v1892, %v2000
      %v2055 = vadd.f32 %v1897, %v2005
      %v2056 = vadd.f32 %v1900, %v2008
      %v2057 = vadd.f32 %v1905, %v2013
      %v2058 = vadd.f32 %v1908, %v2016
      %v2059 = vadd.f32 %v1913, %v2021
      %v2060 = vadd.f32 %v1916, %v2024
      %v2061 = vadd.f32 %v1921, %v2029
      %v2062 = vadd.f32 %v1924, %v2032
      %v2063 = vadd.f32 %v1929, %v2037
      %v2064 = vadd.f32 %v1932, %v2040
      %v2065 = vadd.f32 %v1937, %v2045
      %v2066 = vadd.f32 %v1940, %v2048
      %vm2067 = vcmp.ge.f32.partialorder %v2051, 0.0
      %vm2068 = vcmp.ge.f32.partialorder %v2052, 0.0
      %vm2069 = vcmp.ge.f32.partialorder %v2053, 0.0
      %vm2070 = vcmp.ge.f32.partialorder %v2054, 0.0
      %vm2071 = vcmp.ge.f32.partialorder %v2055, 0.0
      %vm2072 = vcmp.ge.f32.partialorder %v2056, 0.0
      %vm2073 = vcmp.ge.f32.partialorder %v2057, 0.0
      %vm2074 = vcmp.ge.f32.partialorder %v2058, 0.0
      %vm2075 = vcmp.ge.f32.partialorder %v2059, 0.0
      %vm2076 = vcmp.ge.f32.partialorder %v2060, 0.0
      %vm2077 = vcmp.ge.f32.partialorder %v2061, 0.0
      %vm2078 = vcmp.ge.f32.partialorder %v2062, 0.0
      %vm2079 = vcmp.ge.f32.partialorder %v2063, 0.0
      %vm2080 = vcmp.ge.f32.partialorder %v2064, 0.0
      %vm2081 = vcmp.ge.f32.partialorder %v2065, 0.0
      %vm2082 = vcmp.ge.f32.partialorder %v2066, 0.0
      %v2083 = vmul.f32 %v2051, 0.01
      %v2084 = vmul.f32 %v2052, 0.01
      %v2085 = vmul.f32 %v2053, 0.01
      %v2086 = vmul.f32 %v2054, 0.01
      %v2087 = vmul.f32 %v2055, 0.01
      %v2088 = vmul.f32 %v2056, 0.01
      %v2089 = vmul.f32 %v2057, 0.01
      %v2090 = vmul.f32 %v2058, 0.01
      %v2091 = vmul.f32 %v2059, 0.01
      %v2092 = vmul.f32 %v2060, 0.01
      %v2093 = vmul.f32 %v2061, 0.01
      %v2094 = vmul.f32 %v2062, 0.01
      %v2095 = vmul.f32 %v2063, 0.01
      %v2096 = vmul.f32 %v2064, 0.01
      %v2097 = vmul.f32 %v2065, 0.01
      %v2098 = vmul.f32 %v2066, 0.01
      %v2099 = vsel %vm2067, %v2051, %v2083
      %v2100 = vsel %vm2068, %v2052, %v2084
      %v2101 = vsel %vm2069, %v2053, %v2085
      %v2102 = vsel %vm2070, %v2054, %v2086
      %v2103 = vsel %vm2071, %v2055, %v2087
      %v2104 = vsel %vm2072, %v2056, %v2088
      %v2105 = vsel %vm2073, %v2057, %v2089
      %v2106 = vsel %vm2074, %v2058, %v2090
      %v2107 = vsel %vm2075, %v2059, %v2091
      %v2108 = vsel %vm2076, %v2060, %v2092
      %v2109 = vsel %vm2077, %v2061, %v2093
      %v2110 = vsel %vm2078, %v2062, %v2094
      %v2111 = vsel %vm2079, %v2063, %v2095
      %v2112 = vsel %vm2080, %v2064, %v2096
      %v2113 = vsel %vm2081, %v2065, %v2097
      %v2114 = vsel %vm2082, %v2066, %v2098
      %2115 = vst.msk [vmem:[%s429] sm:$0xff] %vm1821, %v2099
      %2116 = vst.msk [vmem:[%s429 + $0x8] sm:$0xff] %vm1821, %v2100
      %2117 = vst.msk [vmem:[%s429 + $0x10] sm:$0xff] %vm1821, %v2101
      %2118 = vst.msk [vmem:[%s429 + $0x18] sm:$0xff] %vm1821, %v2102
      %2119 = vst.msk [vmem:[%s429 + $0x20] sm:$0xff] %vm1821, %v2103
      %2120 = vst.msk [vmem:[%s429 + $0x28] sm:$0xff] %vm1821, %v2104
      %2121 = vst.msk [vmem:[%s429 + $0x30] sm:$0xff] %vm1821, %v2105
      %2122 = vst.msk [vmem:[%s429 + $0x38] sm:$0xff] %vm1821, %v2106
      %2123 = vst.msk [vmem:[%s429 + $0x40] sm:$0xff] %vm1821, %v2107
      %2124 = vst.msk [vmem:[%s429 + $0x48] sm:$0xff] %vm1821, %v2108
      %2125 = vst.msk [vmem:[%s429 + $0x50] sm:$0xff] %vm1821, %v2109
      %2126 = vst.msk [vmem:[%s429 + $0x58] sm:$0xff] %vm1821, %v2110
      %2127 = vst.msk [vmem:[%s429 + $0x60] sm:$0xff] %vm1821, %v2111
      %2128 = vst.msk [vmem:[%s429 + $0x68] sm:$0xff] %vm1821, %v2112
      %2129 = vst.msk [vmem:[%s429 + $0x70] sm:$0xff] %vm1821, %v2113
      %2130 = vst.msk [vmem:[%s429 + $0x78] sm:$0xff] %vm1821, %v2114
      %p2131 = scmp.lt.s32.totalorder %s25, 1
      %s2132 = scalar_select %p2131, %s25, 1
      %p2133 = scmp.lt.s32.totalorder %s26, 1
      %s2134 = scalar_select %p2133, %s26, 1
      %s2135 = smul.addr %s2134, 16
      %s2136 = smul.addr %s2132, 32
      %s2137 = sadd.s32 %s2135, %s2136
      %s2138 = smul.addr %s2137, 8
      %s2139 = scalar_lea.vmem %s10, %s2138
      // Predicated region
      $region61: #{_lambda_.1} parent=59 // pred_check
        %p2140 = pneg %p277
      $region62: #{_lambda_.1} parent=59 // pred_check_branch
        %2142 = sbr.rel (%p2140) target = $region64
      $region63: #{_lambda_.1} parent=59 // pred_region
        _
      $region64: #{_lambda_.1} parent=59 // pred_fallthru
        _
    $region60: #{_lambda_.1} parent=5 // pred_fallthru
      _
    %p2143 = scmp.le.s32.totalorder 2, %s16
    // Predicated region
    $region65: #{_lambda_.1} parent=5 // pred_check
      %p2144 = pneg %p2143
    $region66: #{_lambda_.1} parent=5 // pred_check_branch
      %2146 = sbr.rel (%p2144) target = $region68
    $region67: #{_lambda_.1} parent=5 // pred_region
      %s2147 = ssub.s32 %s16, 2
      // Predicated region
      $region69: #{_lambda_.1} parent=67 // pred_check
        %p2148 = pneg %p283
      $region70: #{_lambda_.1} parent=67 // pred_check_branch
        %2150 = sbr.rel (%p2148) target = $region72
      $region71: #{_lambda_.1} parent=67 // pred_region
        %p2151 = scmp.lt.s32.totalorder %s27, 1
        %s2152 = scalar_select %p2151, %s27, 1
        %p2153 = scmp.lt.s32.totalorder %s28, 1
        %s2154 = scalar_select %p2153, %s28, 1
        %s2155 = smul.addr %s2154, 16
        %s2156 = smul.addr %s2152, 32
        %s2157 = sadd.s32 %s2155, %s2156
        %s2158 = smul.addr %s2157, 8
        %s2159 = scalar_lea.vmem %s10, %s2158
      $region72: #{_lambda_.1} parent=67 // pred_fallthru
        _
    $region68: #{_lambda_.1} parent=5 // pred_fallthru
      _
  $region6: #{_lambda_.1} parent=0 // loop_footer
    %s20 = sadd.s32 1, %s16
  $region7: #{_lambda_.1} parent=0 // loop_footer_branch
    %15 = sbr.rel target = $region3
  $region8: #{_lambda_.1} parent=0 // loop_exit
    _

</llo_original>
